<compile_context>
chip_gen: v6e
topology: v6e:2x2x1
jax: 0.10.0
libtpu: 0.0.40
codegen_flags: <defaults>
</compile_context>

<pallas_src>
import functools

import jax
import jax.numpy as jnp
from jax.experimental import pallas as pl
from jax.experimental.pallas import tpu as pltpu

# Global hyper-parameter from the original script (module-level `lambda_for_mor`).
LAMBDA_FOR_MOR = 0.5


def _round_up(x, m):
    return -(-x // m) * m


def _vmem_physical_bytes():
    """Physical VMEM per core (guarded; assume 64 MiB if the query fails)."""
    try:
        info = pltpu.get_tpu_info()
        return int(getattr(info, "vmem_capacity_bytes", 64 * 1024 * 1024))
    except Exception:
        return 64 * 1024 * 1024


def _vmem_limit_bytes(phys):
    # v5e / v6e: 128 MiB physical -> raise the scoped limit to ~100 MiB.
    # v7x: 64 MiB physical -> stay at 48 MiB with headroom.
    if phys >= 128 * 1024 * 1024:
        return 100 * 1024 * 1024
    return 48 * 1024 * 1024


def _choose_tb(batch, cap):
    """Batch-tile size: as large as the budget allows, multiple of 8, and
    preferring >=2 grid steps so ("parallel",) uses both v7x TensorCores."""
    tb = max(8, min(int(cap), _round_up(max(batch, 1), 8)))
    tb = (tb // 8) * 8
    if batch > 8 and _round_up(batch, tb) // tb < 2:
        tb = max(8, (_round_up(batch, 16) // 2 // 8) * 8)
    return tb


# ---------------------------------------------------------------------------
# Kernels
# ---------------------------------------------------------------------------

def _cbow_fused_kernel(emb_ref, ctx_ids_ref, ctx_w_ref, neg_ids_ref, out_ref):
    """Fully fused CBOW forward with a VMEM-resident embedding table.

    emb_ref     : (Vp, Dp)  padded embedding table (resident across the grid)
    ctx_ids_ref : (TB, C)   int32 ids (2W input words ++ 2W*M morpheme words)
    ctx_w_ref   : (TB, C)   per-id weights (lam / mask*(1-lam)/max_mor)
    neg_ids_ref : (TB, S)   int32 ids of the sampled (negative + positive) words
    out_ref     : (TB, S)   softmax probabilities (lane-dense)
    """
    emb = emb_ref[...].astype(jnp.float32)            # (Vp, Dp)
    ctx_ids = ctx_ids_ref[...]                        # (TB, C) int32
    ctx_w = ctx_w_ref[...].astype(jnp.float32)        # (TB, C)
    neg_ids = neg_ids_ref[...]                        # (TB, S) int32

    TB, C = ctx_ids.shape
    S = neg_ids.shape[1]
    Vp = emb.shape[0]

    iota_v = jax.lax.broadcasted_iota(jnp.int32, (1, Vp), 1)       # (1, Vp)

    # Weighted one-hot vocabulary histogram:
    #   wv[b, v] = sum_j ctx_w[b, j] * [ctx_ids[b, j] == v]
    # so that h = wv @ E reproduces the gather + weighted sum of the reference.
    wv = jnp.zeros((TB, Vp), dtype=jnp.float32)
    for j in range(C):                                             # C small, unrolled
        onehot = (ctx_ids[:, j:j + 1] == iota_v).astype(jnp.float32)   # (TB, Vp)
        wv = wv + ctx_w[:, j:j + 1] * onehot

    # Context vector and per-vocab scores: two MXU matmuls on the resident table.
    h = jnp.dot(wv, emb, preferred_element_type=jnp.float32)            # (TB, Dp)
    scores = jax.lax.dot_general(h, emb, (((1,), (1,)), ((), ())),
                                 preferred_element_type=jnp.float32)    # (TB, Vp)

    # Select the S sampled logits (one-hot select + lane reduction).
    s_iota = jax.lax.broadcasted_iota(jnp.int32, (1, S), 1)             # (1, S)
    logits = jnp.zeros((TB, S), dtype=jnp.float32)
    for s in range(S):
        sel = (neg_ids[:, s:s + 1] == iota_v).astype(jnp.float32)       # (TB, Vp)
        col = jnp.sum(sel * scores, axis=-1, keepdims=True)             # (TB, 1)
        logits = logits + (s_iota == s).astype(jnp.float32) * col       # -> lane s

    # Lane-dense softmax over the sample axis.
    m = jnp.max(logits, axis=-1, keepdims=True)
    e = jnp.exp(logits - m)
    denom = jnp.sum(e, axis=-1, keepdims=True)
    out_ref[...] = (e * pl.reciprocal(denom, approx=True)).astype(out_ref.dtype)


def _cbow_gathered_kernel(ctx_vecs_ref, ctx_w_ref, neg_vecs_ref, out_ref):
    """Pre-gathered fallback (large vocabularies).  All blocks are lane-dense 2-D.

    ctx_vecs_ref : (TB, C*Dp)  gathered context vectors, flattened
    ctx_w_ref    : (TB, C)     per-vector weights
    neg_vecs_ref : (TB, S*Dp)  gathered sample vectors, flattened
    out_ref      : (TB, S)     softmax probabilities
    """
    w = ctx_w_ref[...].astype(jnp.float32)            # (TB, C)
    TB, C = w.shape
    S = out_ref.shape[1]
    Dp = ctx_vecs_ref.shape[1] // C

    # h[b] = sum_j w[b, j] * ctx[b, j]   (lane-broadcast FMAs, one vreg-column slice each)
    h = jnp.zeros((TB, Dp), dtype=jnp.float32)
    for j in range(C):
        vec = ctx_vecs_ref[:, j * Dp:(j + 1) * Dp].astype(jnp.float32)  # (TB, Dp)
        h = h + w[:, j:j + 1] * vec

    s_iota = jax.lax.broadcasted_iota(jnp.int32, (1, S), 1)             # (1, S)
    logits = jnp.zeros((TB, S), dtype=jnp.float32)
    for s in range(S):
        nv = neg_vecs_ref[:, s * Dp:(s + 1) * Dp].astype(jnp.float32)   # (TB, Dp)
        col = jnp.sum(nv * h, axis=-1, keepdims=True)                   # (TB, 1)
        logits = logits + (s_iota == s).astype(jnp.float32) * col

    m = jnp.max(logits, axis=-1, keepdims=True)
    e = jnp.exp(logits - m)
    denom = jnp.sum(e, axis=-1, keepdims=True)
    out_ref[...] = (e * pl.reciprocal(denom, approx=True)).astype(out_ref.dtype)


# ---------------------------------------------------------------------------
# Wrapper
# ---------------------------------------------------------------------------

def word2vec_cbow_forward(embedding, input_words, negative_samples, mor_words,
                          mor_mask, *, window, max_mor,
                          lambda_for_mor=LAMBDA_FOR_MOR, block_b=None,
                          fuse_gather=None):
    """Pallas-backed equivalent of Word2VecCBOW.forward.

    embedding        : (V, D) float32 or bfloat16 embedding table
    input_words      : (B, 2*window) int
    negative_samples : (B, S) int,  S = nb_negative + 1
    mor_words        : (B, 2*window*max_mor) int
    mor_mask         : (B, 2*window*max_mor) float (0/1)
    returns          : (B, S) float32 softmax probabilities
    """
    B = input_words.shape[0]
    V, D = embedding.shape
    two_w = 2 * window
    S = negative_samples.shape[1]
    C = two_w * (1 + max_mor)
    lam = float(lambda_for_mor)

    Dp = _round_up(D, 128)
    Vp = _round_up(V, 128)

    # --- flattened context ids + folded weights (tiny arrays) ---
    ctx_ids = jnp.concatenate([input_words.astype(jnp.int32),
                               mor_words.astype(jnp.int32)], axis=1)       # (B, C)
    w_in = jnp.full((B, two_w), lam, dtype=jnp.float32)
    w_mor = (mor_mask.reshape(B, two_w * max_mor).astype(jnp.float32)
             * ((1.0 - lam) / float(max_mor)))
    ctx_w = jnp.concatenate([w_in, w_mor], axis=1)                         # (B, C)
    neg_ids = negative_samples.astype(jnp.int32)                           # (B, S)

    # --- pad the table's feature dim once (lane alignment) ---
    emb = embedding
    if Dp != D:
        emb = jnp.pad(emb, ((0, 0), (0, Dp - D)))

    # --- fused vs. pre-gathered path selection ---
    table_f32_bytes = Vp * Dp * 4
    if fuse_gather is None:
        fuse_gather = (table_f32_bytes <= 2 * 1024 * 1024) and (Vp <= 2048)

    # --- generation-aware VMEM budgets & batch tile ---
    phys = _vmem_physical_bytes()
    vmem_limit = _vmem_limit_bytes(phys)
    per_buffer_budget = (32 * 1024 * 1024 if phys >= 128 * 1024 * 1024
                         else 16 * 1024 * 1024)
    if fuse_gather:
        # Only ids/weights stream per row; cap TB by the (TB, Vp) intermediates.
        cap = max(8, min(256, (8 * 1024 * 1024) // max(1, 6 * Vp * 4)))
    else:
        itemsize = jnp.dtype(embedding.dtype).itemsize
        bytes_per_row = itemsize * (C * Dp + S * Dp) + 4 * C + 4 * S
        cap = max(8, min(1024, per_buffer_budget // max(1, bytes_per_row)))

    if block_b is not None:
        TB = max(8, (int(block_b) // 8) * 8)
    else:
        TB = _choose_tb(B, cap)
    TB = min(TB, _round_up(max(B, 1), 8))
    Bp = _round_up(B, TB)

    # --- pad the (tiny) index / weight arrays BEFORE any gather ---
    if Bp != B:
        pad = Bp - B
        ctx_ids = jnp.pad(ctx_ids, ((0, pad), (0, 0)))
        ctx_w = jnp.pad(ctx_w, ((0, pad), (0, 0)))       # zero weights -> h = 0
        neg_ids = jnp.pad(neg_ids, ((0, pad), (0, 0)))

    cparams = pltpu.CompilerParams(
        dimension_semantics=("parallel",),
        vmem_limit_bytes=vmem_limit,
    )

    if fuse_gather:
        emb_p = emb
        if Vp != V:
            emb_p = jnp.pad(emb_p, ((0, Vp - V), (0, 0)))
        out = pl.pallas_call(
            _cbow_fused_kernel,
            out_shape=jax.ShapeDtypeStruct((Bp, S), jnp.float32),
            grid=(Bp // TB,),
            in_specs=[
                pl.BlockSpec((Vp, Dp), lambda b: (0, 0)),    # resident table
                pl.BlockSpec((TB, C), lambda b: (b, 0)),
                pl.BlockSpec((TB, C), lambda b: (b, 0)),
                pl.BlockSpec((TB, S), lambda b: (b, 0)),
            ],
            out_specs=pl.BlockSpec((TB, S), lambda b: (b, 0)),
            compiler_params=cparams,
        )(emb_p, ctx_ids, ctx_w, neg_ids)
        return out[:B]

    # Fallback: XLA-side gathers feeding lane-dense 2-D blocks.
    # TODO(synk): replace with scalar-prefetched ids + manual pltpu.make_async_copy
    # row DMAs from a pl.ANY table to avoid the extra HBM round trip.
    ctx_vecs = jnp.take(emb, ctx_ids, axis=0).reshape(Bp, C * Dp)
    neg_vecs = jnp.take(emb, neg_ids, axis=0).reshape(Bp, S * Dp)
    out = pl.pallas_call(
        _cbow_gathered_kernel,
        out_shape=jax.ShapeDtypeStruct((Bp, S), jnp.float32),
        grid=(Bp // TB,),
        in_specs=[
            pl.BlockSpec((TB, C * Dp), lambda b: (b, 0)),
            pl.BlockSpec((TB, C), lambda b: (b, 0)),
            pl.BlockSpec((TB, S * Dp), lambda b: (b, 0)),
        ],
        out_specs=pl.BlockSpec((TB, S), lambda b: (b, 0)),
        compiler_params=cparams,
    )(ctx_vecs, ctx_w, neg_vecs)
    return out[:B]


# ---------------------------------------------------------------------------
# Pure-JAX reference (mirrors the PyTorch forward, f32 compute)
# ---------------------------------------------------------------------------

def reference_forward(embedding, input_words, negative_samples, mor_words,
                      mor_mask, *, window, max_mor,
                      lambda_for_mor=LAMBDA_FOR_MOR):
    B = input_words.shape[0]
    two_w = 2 * window
    emb = embedding.astype(jnp.float32)
    input_vecs = jnp.take(emb, input_words, axis=0)                       # (B, 2W, D)
    mor_vecs = jnp.take(emb, mor_words, axis=0).reshape(B, two_w, max_mor, -1)
    mask = mor_mask.reshape(B, two_w, max_mor, 1).astype(jnp.float32)
    mor_sum = jnp.sum(mor_vecs * mask, axis=2) / max_mor
    mixed = input_vecs * lambda_for_mor + mor_sum * (1.0 - lambda_for_mor)
    h = jnp.sum(mixed, axis=1)                                            # (B, D)
    neg_vecs = jnp.take(emb, negative_samples, axis=0)                    # (B, S, D)
    logits = jnp.sum(neg_vecs * h[:, None, :], axis=-1)                   # (B, S)
    return jax.nn.softmax(logits, axis=-1)


if __name__ == "__main__":
    # Small, deterministic configuration consistent with the module.
    window = 2            # -> 2*window = 4 context words
    max_mor = 3           # morphemes per context word
    nb_negative = 5       # -> S = nb_negative + 1 samples
    embedding_dim = 128   # lane-dense embedding dim
    n_words = 50
    n_mor = 20
    vocab = n_words + n_mor + 1
    S = nb_negative + 1

    key = jax.random.PRNGKey(0)
    k_emb, k_in, k_neg, k_mor, k_mask = jax.random.split(key, 5)

    def make_inputs(batch):
        embedding = jax.random.normal(k_emb, (vocab, embedding_dim), dtype=jnp.float32)
        input_words = jax.random.randint(k_in, (batch, 2 * window), 0, vocab,
                                         dtype=jnp.int32)
        negative_samples = jax.random.randint(k_neg, (batch, S), 0, vocab,
                                              dtype=jnp.int32)
        mor_words = jax.random.randint(k_mor, (batch, 2 * window * max_mor), 0,
                                       vocab, dtype=jnp.int32)
        mor_mask = (jax.random.uniform(k_mask, (batch, 2 * window * max_mor)) > 0.5
                    ).astype(jnp.float32)
        return embedding, input_words, negative_samples, mor_words, mor_mask

    tol = dict(atol=2e-3, rtol=2e-3)   # headroom for the approx EUP reciprocal

    # 1) Fused-gather path (VMEM-resident table), f32 table, default batch tile.
    emb, iw, ns, mw, mm = make_inputs(64)
    out = word2vec_cbow_forward(emb, iw, ns, mw, mm,
                                window=window, max_mor=max_mor)
    out = jax.block_until_ready(out)
    ref = reference_forward(emb, iw, ns, mw, mm, window=window, max_mor=max_mor)
    assert out.shape == (64, S)
    assert bool(jnp.allclose(out, ref, **tol)), "fused f32 mismatch vs reference"

    # 2) Fused path, bf16 table, non-dividing batch + explicit small tile
    #    (exercises index-side batch padding and a multi-step "parallel" grid).
    emb2, iw2, ns2, mw2, mm2 = make_inputs(80)
    emb2 = emb2.astype(jnp.bfloat16)
    out2 = word2vec_cbow_forward(emb2, iw2, ns2, mw2, mm2,
                                 window=window, max_mor=max_mor, block_b=32)
    out2 = jax.block_until_ready(out2)
    ref2 = reference_forward(emb2, iw2, ns2, mw2, mm2,
                             window=window, max_mor=max_mor)
    assert out2.shape == (80, S)
    assert bool(jnp.allclose(out2, ref2, **tol)), "fused bf16 mismatch vs reference"

    # 3) Pre-gathered fallback path (what a large vocabulary would use).
    emb3, iw3, ns3, mw3, mm3 = make_inputs(48)
    out3 = word2vec_cbow_forward(emb3, iw3, ns3, mw3, mm3,
                                 window=window, max_mor=max_mor, fuse_gather=False)
    out3 = jax.block_until_ready(out3)
    ref3 = reference_forward(emb3, iw3, ns3, mw3, mm3,
                             window=window, max_mor=max_mor)
    assert out3.shape == (48, S)
    assert bool(jnp.allclose(out3, ref3, **tol)), "gathered-path mismatch vs reference"

    print("KERNEL_OK")
</pallas_src>

<mosaic_0001>
module attributes {stable_mosaic.version = 11 : i64} {
  func.func @_cbow_fused_kernel(%arg0: i32, %arg1: memref<128x128xf32, #tpu.memory_space<vmem>>, %arg2: memref<32x16xi32, #tpu.memory_space<vmem>>, %arg3: memref<32x16xf32, #tpu.memory_space<vmem>>, %arg4: memref<32x6xi32, #tpu.memory_space<vmem>>, %arg5: memref<32x6xf32, #tpu.memory_space<vmem>>) attributes {dimension_semantics = [#tpu.dimension_semantics<parallel>], iteration_bounds = array<i64: 2>, scalar_prefetch = 0 : i64, scratch_operands = 0 : i64, tpu.core_type = #tpu.core_type<tc>, window_params = [{pipeline_mode = #tpu.pipeline_mode<synchronous>, transform_indices = @transform_0, window_bounds = array<i64: 128, 128>}, {transform_indices = @transform_1, window_bounds = array<i64: 32, 16>}, {transform_indices = @transform_2, window_bounds = array<i64: 32, 16>}, {transform_indices = @transform_3, window_bounds = array<i64: 32, 6>}, {transform_indices = @transform_4, window_bounds = array<i64: 32, 6>}]} {
    %c0 = arith.constant 0 : index
    %c0_0 = arith.constant 0 : index
    %0 = vector.load %arg1[%c0, %c0_0] : memref<128x128xf32, #tpu.memory_space<vmem>>, vector<128x128xf32>
    %c0_1 = arith.constant 0 : index
    %c0_2 = arith.constant 0 : index
    %1 = vector.load %arg2[%c0_1, %c0_2] : memref<32x16xi32, #tpu.memory_space<vmem>>, vector<32x16xi32>
    %c0_3 = arith.constant 0 : index
    %c0_4 = arith.constant 0 : index
    %2 = vector.load %arg3[%c0_3, %c0_4] : memref<32x16xf32, #tpu.memory_space<vmem>>, vector<32x16xf32>
    %c0_5 = arith.constant 0 : index
    %c0_6 = arith.constant 0 : index
    %3 = vector.load %arg4[%c0_5, %c0_6] : memref<32x6xi32, #tpu.memory_space<vmem>>, vector<32x6xi32>
    %4 = tpu.iota {dimensions = array<i32: 1>} : vector<1x128xi32>
    %cst = arith.constant 0.000000e+00 : f32
    %5 = vector.broadcast %cst : f32 to vector<32x128xf32>
    %6 = vector.extract_strided_slice %1 {offsets = [0, 0], sizes = [32, 1], strides = [1, 1]} : vector<32x16xi32> to vector<32x1xi32>
    %7 = vector.broadcast %6 : vector<32x1xi32> to vector<32x128xi32>
    %8 = vector.broadcast %4 : vector<1x128xi32> to vector<32x128xi32>
    %9 = arith.cmpi eq, %7, %8 : vector<32x128xi32>
    %10 = arith.extui %9 : vector<32x128xi1> to vector<32x128xi32>
    %11 = arith.sitofp %10 : vector<32x128xi32> to vector<32x128xf32>
    %12 = vector.extract_strided_slice %2 {offsets = [0, 0], sizes = [32, 1], strides = [1, 1]} : vector<32x16xf32> to vector<32x1xf32>
    %13 = vector.broadcast %12 : vector<32x1xf32> to vector<32x128xf32>
    %14 = arith.mulf %13, %11 : vector<32x128xf32>
    %15 = arith.addf %5, %14 : vector<32x128xf32>
    %16 = vector.extract_strided_slice %1 {offsets = [0, 1], sizes = [32, 1], strides = [1, 1]} : vector<32x16xi32> to vector<32x1xi32>
    %17 = vector.broadcast %16 : vector<32x1xi32> to vector<32x128xi32>
    %18 = vector.broadcast %4 : vector<1x128xi32> to vector<32x128xi32>
    %19 = arith.cmpi eq, %17, %18 : vector<32x128xi32>
    %20 = arith.extui %19 : vector<32x128xi1> to vector<32x128xi32>
    %21 = arith.sitofp %20 : vector<32x128xi32> to vector<32x128xf32>
    %22 = vector.extract_strided_slice %2 {offsets = [0, 1], sizes = [32, 1], strides = [1, 1]} : vector<32x16xf32> to vector<32x1xf32>
    %23 = vector.broadcast %22 : vector<32x1xf32> to vector<32x128xf32>
    %24 = arith.mulf %23, %21 : vector<32x128xf32>
    %25 = arith.addf %15, %24 : vector<32x128xf32>
    %26 = vector.extract_strided_slice %1 {offsets = [0, 2], sizes = [32, 1], strides = [1, 1]} : vector<32x16xi32> to vector<32x1xi32>
    %27 = vector.broadcast %26 : vector<32x1xi32> to vector<32x128xi32>
    %28 = vector.broadcast %4 : vector<1x128xi32> to vector<32x128xi32>
    %29 = arith.cmpi eq, %27, %28 : vector<32x128xi32>
    %30 = arith.extui %29 : vector<32x128xi1> to vector<32x128xi32>
    %31 = arith.sitofp %30 : vector<32x128xi32> to vector<32x128xf32>
    %32 = vector.extract_strided_slice %2 {offsets = [0, 2], sizes = [32, 1], strides = [1, 1]} : vector<32x16xf32> to vector<32x1xf32>
    %33 = vector.broadcast %32 : vector<32x1xf32> to vector<32x128xf32>
    %34 = arith.mulf %33, %31 : vector<32x128xf32>
    %35 = arith.addf %25, %34 : vector<32x128xf32>
    %36 = vector.extract_strided_slice %1 {offsets = [0, 3], sizes = [32, 1], strides = [1, 1]} : vector<32x16xi32> to vector<32x1xi32>
    %37 = vector.broadcast %36 : vector<32x1xi32> to vector<32x128xi32>
    %38 = vector.broadcast %4 : vector<1x128xi32> to vector<32x128xi32>
    %39 = arith.cmpi eq, %37, %38 : vector<32x128xi32>
    %40 = arith.extui %39 : vector<32x128xi1> to vector<32x128xi32>
    %41 = arith.sitofp %40 : vector<32x128xi32> to vector<32x128xf32>
    %42 = vector.extract_strided_slice %2 {offsets = [0, 3], sizes = [32, 1], strides = [1, 1]} : vector<32x16xf32> to vector<32x1xf32>
    %43 = vector.broadcast %42 : vector<32x1xf32> to vector<32x128xf32>
    %44 = arith.mulf %43, %41 : vector<32x128xf32>
    %45 = arith.addf %35, %44 : vector<32x128xf32>
    %46 = vector.extract_strided_slice %1 {offsets = [0, 4], sizes = [32, 1], strides = [1, 1]} : vector<32x16xi32> to vector<32x1xi32>
    %47 = vector.broadcast %46 : vector<32x1xi32> to vector<32x128xi32>
    %48 = vector.broadcast %4 : vector<1x128xi32> to vector<32x128xi32>
    %49 = arith.cmpi eq, %47, %48 : vector<32x128xi32>
    %50 = arith.extui %49 : vector<32x128xi1> to vector<32x128xi32>
    %51 = arith.sitofp %50 : vector<32x128xi32> to vector<32x128xf32>
    %52 = vector.extract_strided_slice %2 {offsets = [0, 4], sizes = [32, 1], strides = [1, 1]} : vector<32x16xf32> to vector<32x1xf32>
    %53 = vector.broadcast %52 : vector<32x1xf32> to vector<32x128xf32>
    %54 = arith.mulf %53, %51 : vector<32x128xf32>
    %55 = arith.addf %45, %54 : vector<32x128xf32>
    %56 = vector.extract_strided_slice %1 {offsets = [0, 5], sizes = [32, 1], strides = [1, 1]} : vector<32x16xi32> to vector<32x1xi32>
    %57 = vector.broadcast %56 : vector<32x1xi32> to vector<32x128xi32>
    %58 = vector.broadcast %4 : vector<1x128xi32> to vector<32x128xi32>
    %59 = arith.cmpi eq, %57, %58 : vector<32x128xi32>
    %60 = arith.extui %59 : vector<32x128xi1> to vector<32x128xi32>
    %61 = arith.sitofp %60 : vector<32x128xi32> to vector<32x128xf32>
    %62 = vector.extract_strided_slice %2 {offsets = [0, 5], sizes = [32, 1], strides = [1, 1]} : vector<32x16xf32> to vector<32x1xf32>
    %63 = vector.broadcast %62 : vector<32x1xf32> to vector<32x128xf32>
    %64 = arith.mulf %63, %61 : vector<32x128xf32>
    %65 = arith.addf %55, %64 : vector<32x128xf32>
    %66 = vector.extract_strided_slice %1 {offsets = [0, 6], sizes = [32, 1], strides = [1, 1]} : vector<32x16xi32> to vector<32x1xi32>
    %67 = vector.broadcast %66 : vector<32x1xi32> to vector<32x128xi32>
    %68 = vector.broadcast %4 : vector<1x128xi32> to vector<32x128xi32>
    %69 = arith.cmpi eq, %67, %68 : vector<32x128xi32>
    %70 = arith.extui %69 : vector<32x128xi1> to vector<32x128xi32>
    %71 = arith.sitofp %70 : vector<32x128xi32> to vector<32x128xf32>
    %72 = vector.extract_strided_slice %2 {offsets = [0, 6], sizes = [32, 1], strides = [1, 1]} : vector<32x16xf32> to vector<32x1xf32>
    %73 = vector.broadcast %72 : vector<32x1xf32> to vector<32x128xf32>
    %74 = arith.mulf %73, %71 : vector<32x128xf32>
    %75 = arith.addf %65, %74 : vector<32x128xf32>
    %76 = vector.extract_strided_slice %1 {offsets = [0, 7], sizes = [32, 1], strides = [1, 1]} : vector<32x16xi32> to vector<32x1xi32>
    %77 = vector.broadcast %76 : vector<32x1xi32> to vector<32x128xi32>
    %78 = vector.broadcast %4 : vector<1x128xi32> to vector<32x128xi32>
    %79 = arith.cmpi eq, %77, %78 : vector<32x128xi32>
    %80 = arith.extui %79 : vector<32x128xi1> to vector<32x128xi32>
    %81 = arith.sitofp %80 : vector<32x128xi32> to vector<32x128xf32>
    %82 = vector.extract_strided_slice %2 {offsets = [0, 7], sizes = [32, 1], strides = [1, 1]} : vector<32x16xf32> to vector<32x1xf32>
    %83 = vector.broadcast %82 : vector<32x1xf32> to vector<32x128xf32>
    %84 = arith.mulf %83, %81 : vector<32x128xf32>
    %85 = arith.addf %75, %84 : vector<32x128xf32>
    %86 = vector.extract_strided_slice %1 {offsets = [0, 8], sizes = [32, 1], strides = [1, 1]} : vector<32x16xi32> to vector<32x1xi32>
    %87 = vector.broadcast %86 : vector<32x1xi32> to vector<32x128xi32>
    %88 = vector.broadcast %4 : vector<1x128xi32> to vector<32x128xi32>
    %89 = arith.cmpi eq, %87, %88 : vector<32x128xi32>
    %90 = arith.extui %89 : vector<32x128xi1> to vector<32x128xi32>
    %91 = arith.sitofp %90 : vector<32x128xi32> to vector<32x128xf32>
    %92 = vector.extract_strided_slice %2 {offsets = [0, 8], sizes = [32, 1], strides = [1, 1]} : vector<32x16xf32> to vector<32x1xf32>
    %93 = vector.broadcast %92 : vector<32x1xf32> to vector<32x128xf32>
    %94 = arith.mulf %93, %91 : vector<32x128xf32>
    %95 = arith.addf %85, %94 : vector<32x128xf32>
    %96 = vector.extract_strided_slice %1 {offsets = [0, 9], sizes = [32, 1], strides = [1, 1]} : vector<32x16xi32> to vector<32x1xi32>
    %97 = vector.broadcast %96 : vector<32x1xi32> to vector<32x128xi32>
    %98 = vector.broadcast %4 : vector<1x128xi32> to vector<32x128xi32>
    %99 = arith.cmpi eq, %97, %98 : vector<32x128xi32>
    %100 = arith.extui %99 : vector<32x128xi1> to vector<32x128xi32>
    %101 = arith.sitofp %100 : vector<32x128xi32> to vector<32x128xf32>
    %102 = vector.extract_strided_slice %2 {offsets = [0, 9], sizes = [32, 1], strides = [1, 1]} : vector<32x16xf32> to vector<32x1xf32>
    %103 = vector.broadcast %102 : vector<32x1xf32> to vector<32x128xf32>
    %104 = arith.mulf %103, %101 : vector<32x128xf32>
    %105 = arith.addf %95, %104 : vector<32x128xf32>
    %106 = vector.extract_strided_slice %1 {offsets = [0, 10], sizes = [32, 1], strides = [1, 1]} : vector<32x16xi32> to vector<32x1xi32>
    %107 = vector.broadcast %106 : vector<32x1xi32> to vector<32x128xi32>
    %108 = vector.broadcast %4 : vector<1x128xi32> to vector<32x128xi32>
    %109 = arith.cmpi eq, %107, %108 : vector<32x128xi32>
    %110 = arith.extui %109 : vector<32x128xi1> to vector<32x128xi32>
    %111 = arith.sitofp %110 : vector<32x128xi32> to vector<32x128xf32>
    %112 = vector.extract_strided_slice %2 {offsets = [0, 10], sizes = [32, 1], strides = [1, 1]} : vector<32x16xf32> to vector<32x1xf32>
    %113 = vector.broadcast %112 : vector<32x1xf32> to vector<32x128xf32>
    %114 = arith.mulf %113, %111 : vector<32x128xf32>
    %115 = arith.addf %105, %114 : vector<32x128xf32>
    %116 = vector.extract_strided_slice %1 {offsets = [0, 11], sizes = [32, 1], strides = [1, 1]} : vector<32x16xi32> to vector<32x1xi32>
    %117 = vector.broadcast %116 : vector<32x1xi32> to vector<32x128xi32>
    %118 = vector.broadcast %4 : vector<1x128xi32> to vector<32x128xi32>
    %119 = arith.cmpi eq, %117, %118 : vector<32x128xi32>
    %120 = arith.extui %119 : vector<32x128xi1> to vector<32x128xi32>
    %121 = arith.sitofp %120 : vector<32x128xi32> to vector<32x128xf32>
    %122 = vector.extract_strided_slice %2 {offsets = [0, 11], sizes = [32, 1], strides = [1, 1]} : vector<32x16xf32> to vector<32x1xf32>
    %123 = vector.broadcast %122 : vector<32x1xf32> to vector<32x128xf32>
    %124 = arith.mulf %123, %121 : vector<32x128xf32>
    %125 = arith.addf %115, %124 : vector<32x128xf32>
    %126 = vector.extract_strided_slice %1 {offsets = [0, 12], sizes = [32, 1], strides = [1, 1]} : vector<32x16xi32> to vector<32x1xi32>
    %127 = vector.broadcast %126 : vector<32x1xi32> to vector<32x128xi32>
    %128 = vector.broadcast %4 : vector<1x128xi32> to vector<32x128xi32>
    %129 = arith.cmpi eq, %127, %128 : vector<32x128xi32>
    %130 = arith.extui %129 : vector<32x128xi1> to vector<32x128xi32>
    %131 = arith.sitofp %130 : vector<32x128xi32> to vector<32x128xf32>
    %132 = vector.extract_strided_slice %2 {offsets = [0, 12], sizes = [32, 1], strides = [1, 1]} : vector<32x16xf32> to vector<32x1xf32>
    %133 = vector.broadcast %132 : vector<32x1xf32> to vector<32x128xf32>
    %134 = arith.mulf %133, %131 : vector<32x128xf32>
    %135 = arith.addf %125, %134 : vector<32x128xf32>
    %136 = vector.extract_strided_slice %1 {offsets = [0, 13], sizes = [32, 1], strides = [1, 1]} : vector<32x16xi32> to vector<32x1xi32>
    %137 = vector.broadcast %136 : vector<32x1xi32> to vector<32x128xi32>
    %138 = vector.broadcast %4 : vector<1x128xi32> to vector<32x128xi32>
    %139 = arith.cmpi eq, %137, %138 : vector<32x128xi32>
    %140 = arith.extui %139 : vector<32x128xi1> to vector<32x128xi32>
    %141 = arith.sitofp %140 : vector<32x128xi32> to vector<32x128xf32>
    %142 = vector.extract_strided_slice %2 {offsets = [0, 13], sizes = [32, 1], strides = [1, 1]} : vector<32x16xf32> to vector<32x1xf32>
    %143 = vector.broadcast %142 : vector<32x1xf32> to vector<32x128xf32>
    %144 = arith.mulf %143, %141 : vector<32x128xf32>
    %145 = arith.addf %135, %144 : vector<32x128xf32>
    %146 = vector.extract_strided_slice %1 {offsets = [0, 14], sizes = [32, 1], strides = [1, 1]} : vector<32x16xi32> to vector<32x1xi32>
    %147 = vector.broadcast %146 : vector<32x1xi32> to vector<32x128xi32>
    %148 = vector.broadcast %4 : vector<1x128xi32> to vector<32x128xi32>
    %149 = arith.cmpi eq, %147, %148 : vector<32x128xi32>
    %150 = arith.extui %149 : vector<32x128xi1> to vector<32x128xi32>
    %151 = arith.sitofp %150 : vector<32x128xi32> to vector<32x128xf32>
    %152 = vector.extract_strided_slice %2 {offsets = [0, 14], sizes = [32, 1], strides = [1, 1]} : vector<32x16xf32> to vector<32x1xf32>
    %153 = vector.broadcast %152 : vector<32x1xf32> to vector<32x128xf32>
    %154 = arith.mulf %153, %151 : vector<32x128xf32>
    %155 = arith.addf %145, %154 : vector<32x128xf32>
    %156 = vector.extract_strided_slice %1 {offsets = [0, 15], sizes = [32, 1], strides = [1, 1]} : vector<32x16xi32> to vector<32x1xi32>
    %157 = vector.broadcast %156 : vector<32x1xi32> to vector<32x128xi32>
    %158 = vector.broadcast %4 : vector<1x128xi32> to vector<32x128xi32>
    %159 = arith.cmpi eq, %157, %158 : vector<32x128xi32>
    %160 = arith.extui %159 : vector<32x128xi1> to vector<32x128xi32>
    %161 = arith.sitofp %160 : vector<32x128xi32> to vector<32x128xf32>
    %162 = vector.extract_strided_slice %2 {offsets = [0, 15], sizes = [32, 1], strides = [1, 1]} : vector<32x16xf32> to vector<32x1xf32>
    %163 = vector.broadcast %162 : vector<32x1xf32> to vector<32x128xf32>
    %164 = arith.mulf %163, %161 : vector<32x128xf32>
    %165 = arith.addf %155, %164 : vector<32x128xf32>
    %cst_7 = arith.constant dense<0.000000e+00> : vector<32x128xf32>
    %166 = tpu.matmul %165, %0, %cst_7 {dimension_numbers = #tpu.dot_dimension_numbers<[1], [0], [0], [1], [0, 0, 1, 1], [], []>} : vector<32x128xf32>, vector<128x128xf32>, vector<32x128xf32> -> vector<32x128xf32>
    %cst_8 = arith.constant dense<0.000000e+00> : vector<32x128xf32>
    %167 = tpu.matmul %166, %0, %cst_8 {dimension_numbers = #tpu.dot_dimension_numbers<[1], [1], [0], [0], [0, 0, 1, 0], [], []>} : vector<32x128xf32>, vector<128x128xf32>, vector<32x128xf32> -> vector<32x128xf32>
    %168 = tpu.iota {dimensions = array<i32: 1>} : vector<1x6xi32>
    %cst_9 = arith.constant 0.000000e+00 : f32
    %169 = vector.broadcast %cst_9 : f32 to vector<32x6xf32>
    %170 = vector.extract_strided_slice %3 {offsets = [0, 0], sizes = [32, 1], strides = [1, 1]} : vector<32x6xi32> to vector<32x1xi32>
    %171 = vector.broadcast %170 : vector<32x1xi32> to vector<32x128xi32>
    %172 = vector.broadcast %4 : vector<1x128xi32> to vector<32x128xi32>
    %173 = arith.cmpi eq, %171, %172 : vector<32x128xi32>
    %174 = arith.extui %173 : vector<32x128xi1> to vector<32x128xi32>
    %175 = arith.sitofp %174 : vector<32x128xi32> to vector<32x128xf32>
    %176 = arith.mulf %175, %167 : vector<32x128xf32>
    %cst_10 = arith.constant dense<0.000000e+00> : vector<32xf32>
    %177 = vector.multi_reduction <add>, %176, %cst_10 [1] : vector<32x128xf32> to vector<32xf32>
    %178 = vector.shape_cast %177 : vector<32xf32> to vector<32x1xf32>
    %c0_i32 = arith.constant 0 : i32
    %179 = vector.broadcast %c0_i32 : i32 to vector<1x6xi32>
    %180 = arith.cmpi eq, %168, %179 : vector<1x6xi32>
    %181 = arith.extui %180 : vector<1x6xi1> to vector<1x6xi32>
    %182 = arith.sitofp %181 : vector<1x6xi32> to vector<1x6xf32>
    %183 = vector.broadcast %182 : vector<1x6xf32> to vector<32x6xf32>
    %184 = vector.broadcast %178 : vector<32x1xf32> to vector<32x6xf32>
    %185 = arith.mulf %183, %184 : vector<32x6xf32>
    %186 = arith.addf %169, %185 : vector<32x6xf32>
    %187 = vector.extract_strided_slice %3 {offsets = [0, 1], sizes = [32, 1], strides = [1, 1]} : vector<32x6xi32> to vector<32x1xi32>
    %188 = vector.broadcast %187 : vector<32x1xi32> to vector<32x128xi32>
    %189 = vector.broadcast %4 : vector<1x128xi32> to vector<32x128xi32>
    %190 = arith.cmpi eq, %188, %189 : vector<32x128xi32>
    %191 = arith.extui %190 : vector<32x128xi1> to vector<32x128xi32>
    %192 = arith.sitofp %191 : vector<32x128xi32> to vector<32x128xf32>
    %193 = arith.mulf %192, %167 : vector<32x128xf32>
    %cst_11 = arith.constant dense<0.000000e+00> : vector<32xf32>
    %194 = vector.multi_reduction <add>, %193, %cst_11 [1] : vector<32x128xf32> to vector<32xf32>
    %195 = vector.shape_cast %194 : vector<32xf32> to vector<32x1xf32>
    %c1_i32 = arith.constant 1 : i32
    %196 = vector.broadcast %c1_i32 : i32 to vector<1x6xi32>
    %197 = arith.cmpi eq, %168, %196 : vector<1x6xi32>
    %198 = arith.extui %197 : vector<1x6xi1> to vector<1x6xi32>
    %199 = arith.sitofp %198 : vector<1x6xi32> to vector<1x6xf32>
    %200 = vector.broadcast %199 : vector<1x6xf32> to vector<32x6xf32>
    %201 = vector.broadcast %195 : vector<32x1xf32> to vector<32x6xf32>
    %202 = arith.mulf %200, %201 : vector<32x6xf32>
    %203 = arith.addf %186, %202 : vector<32x6xf32>
    %204 = vector.extract_strided_slice %3 {offsets = [0, 2], sizes = [32, 1], strides = [1, 1]} : vector<32x6xi32> to vector<32x1xi32>
    %205 = vector.broadcast %204 : vector<32x1xi32> to vector<32x128xi32>
    %206 = vector.broadcast %4 : vector<1x128xi32> to vector<32x128xi32>
    %207 = arith.cmpi eq, %205, %206 : vector<32x128xi32>
    %208 = arith.extui %207 : vector<32x128xi1> to vector<32x128xi32>
    %209 = arith.sitofp %208 : vector<32x128xi32> to vector<32x128xf32>
    %210 = arith.mulf %209, %167 : vector<32x128xf32>
    %cst_12 = arith.constant dense<0.000000e+00> : vector<32xf32>
    %211 = vector.multi_reduction <add>, %210, %cst_12 [1] : vector<32x128xf32> to vector<32xf32>
    %212 = vector.shape_cast %211 : vector<32xf32> to vector<32x1xf32>
    %c2_i32 = arith.constant 2 : i32
    %213 = vector.broadcast %c2_i32 : i32 to vector<1x6xi32>
    %214 = arith.cmpi eq, %168, %213 : vector<1x6xi32>
    %215 = arith.extui %214 : vector<1x6xi1> to vector<1x6xi32>
    %216 = arith.sitofp %215 : vector<1x6xi32> to vector<1x6xf32>
    %217 = vector.broadcast %216 : vector<1x6xf32> to vector<32x6xf32>
    %218 = vector.broadcast %212 : vector<32x1xf32> to vector<32x6xf32>
    %219 = arith.mulf %217, %218 : vector<32x6xf32>
    %220 = arith.addf %203, %219 : vector<32x6xf32>
    %221 = vector.extract_strided_slice %3 {offsets = [0, 3], sizes = [32, 1], strides = [1, 1]} : vector<32x6xi32> to vector<32x1xi32>
    %222 = vector.broadcast %221 : vector<32x1xi32> to vector<32x128xi32>
    %223 = vector.broadcast %4 : vector<1x128xi32> to vector<32x128xi32>
    %224 = arith.cmpi eq, %222, %223 : vector<32x128xi32>
    %225 = arith.extui %224 : vector<32x128xi1> to vector<32x128xi32>
    %226 = arith.sitofp %225 : vector<32x128xi32> to vector<32x128xf32>
    %227 = arith.mulf %226, %167 : vector<32x128xf32>
    %cst_13 = arith.constant dense<0.000000e+00> : vector<32xf32>
    %228 = vector.multi_reduction <add>, %227, %cst_13 [1] : vector<32x128xf32> to vector<32xf32>
    %229 = vector.shape_cast %228 : vector<32xf32> to vector<32x1xf32>
    %c3_i32 = arith.constant 3 : i32
    %230 = vector.broadcast %c3_i32 : i32 to vector<1x6xi32>
    %231 = arith.cmpi eq, %168, %230 : vector<1x6xi32>
    %232 = arith.extui %231 : vector<1x6xi1> to vector<1x6xi32>
    %233 = arith.sitofp %232 : vector<1x6xi32> to vector<1x6xf32>
    %234 = vector.broadcast %233 : vector<1x6xf32> to vector<32x6xf32>
    %235 = vector.broadcast %229 : vector<32x1xf32> to vector<32x6xf32>
    %236 = arith.mulf %234, %235 : vector<32x6xf32>
    %237 = arith.addf %220, %236 : vector<32x6xf32>
    %238 = vector.extract_strided_slice %3 {offsets = [0, 4], sizes = [32, 1], strides = [1, 1]} : vector<32x6xi32> to vector<32x1xi32>
    %239 = vector.broadcast %238 : vector<32x1xi32> to vector<32x128xi32>
    %240 = vector.broadcast %4 : vector<1x128xi32> to vector<32x128xi32>
    %241 = arith.cmpi eq, %239, %240 : vector<32x128xi32>
    %242 = arith.extui %241 : vector<32x128xi1> to vector<32x128xi32>
    %243 = arith.sitofp %242 : vector<32x128xi32> to vector<32x128xf32>
    %244 = arith.mulf %243, %167 : vector<32x128xf32>
    %cst_14 = arith.constant dense<0.000000e+00> : vector<32xf32>
    %245 = vector.multi_reduction <add>, %244, %cst_14 [1] : vector<32x128xf32> to vector<32xf32>
    %246 = vector.shape_cast %245 : vector<32xf32> to vector<32x1xf32>
    %c4_i32 = arith.constant 4 : i32
    %247 = vector.broadcast %c4_i32 : i32 to vector<1x6xi32>
    %248 = arith.cmpi eq, %168, %247 : vector<1x6xi32>
    %249 = arith.extui %248 : vector<1x6xi1> to vector<1x6xi32>
    %250 = arith.sitofp %249 : vector<1x6xi32> to vector<1x6xf32>
    %251 = vector.broadcast %250 : vector<1x6xf32> to vector<32x6xf32>
    %252 = vector.broadcast %246 : vector<32x1xf32> to vector<32x6xf32>
    %253 = arith.mulf %251, %252 : vector<32x6xf32>
    %254 = arith.addf %237, %253 : vector<32x6xf32>
    %255 = vector.extract_strided_slice %3 {offsets = [0, 5], sizes = [32, 1], strides = [1, 1]} : vector<32x6xi32> to vector<32x1xi32>
    %256 = vector.broadcast %255 : vector<32x1xi32> to vector<32x128xi32>
    %257 = vector.broadcast %4 : vector<1x128xi32> to vector<32x128xi32>
    %258 = arith.cmpi eq, %256, %257 : vector<32x128xi32>
    %259 = arith.extui %258 : vector<32x128xi1> to vector<32x128xi32>
    %260 = arith.sitofp %259 : vector<32x128xi32> to vector<32x128xf32>
    %261 = arith.mulf %260, %167 : vector<32x128xf32>
    %cst_15 = arith.constant dense<0.000000e+00> : vector<32xf32>
    %262 = vector.multi_reduction <add>, %261, %cst_15 [1] : vector<32x128xf32> to vector<32xf32>
    %263 = vector.shape_cast %262 : vector<32xf32> to vector<32x1xf32>
    %c5_i32 = arith.constant 5 : i32
    %264 = vector.broadcast %c5_i32 : i32 to vector<1x6xi32>
    %265 = arith.cmpi eq, %168, %264 : vector<1x6xi32>
    %266 = arith.extui %265 : vector<1x6xi1> to vector<1x6xi32>
    %267 = arith.sitofp %266 : vector<1x6xi32> to vector<1x6xf32>
    %268 = vector.broadcast %267 : vector<1x6xf32> to vector<32x6xf32>
    %269 = vector.broadcast %263 : vector<32x1xf32> to vector<32x6xf32>
    %270 = arith.mulf %268, %269 : vector<32x6xf32>
    %271 = arith.addf %254, %270 : vector<32x6xf32>
    %cst_16 = arith.constant dense<0xFF800000> : vector<32xf32>
    %272 = vector.multi_reduction <maximumf>, %271, %cst_16 [1] : vector<32x6xf32> to vector<32xf32>
    %273 = vector.shape_cast %272 : vector<32xf32> to vector<32x1xf32>
    %274 = vector.broadcast %273 : vector<32x1xf32> to vector<32x6xf32>
    %275 = arith.subf %271, %274 : vector<32x6xf32>
    %276 = math.exp %275 : vector<32x6xf32>
    %cst_17 = arith.constant dense<0.000000e+00> : vector<32xf32>
    %277 = vector.multi_reduction <add>, %276, %cst_17 [1] : vector<32x6xf32> to vector<32xf32>
    %278 = vector.shape_cast %277 : vector<32xf32> to vector<32x1xf32>
    %279 = tpu.reciprocal %278 {approx = true} : vector<32x1xf32> -> vector<32x1xf32>
    %280 = vector.broadcast %279 : vector<32x1xf32> to vector<32x6xf32>
    %281 = arith.mulf %276, %280 : vector<32x6xf32>
    %c0_18 = arith.constant 0 : index
    %c0_19 = arith.constant 0 : index
    %282 = vector.load %arg5[%c0_18, %c0_19] : memref<32x6xf32, #tpu.memory_space<vmem>>, vector<32x6xf32>
    tpu.vector_store %arg5[%c0_18, %c0_19], %281 {strides = array<i32>} : memref<32x6xf32, #tpu.memory_space<vmem>>, vector<32x6xf32>,
    return
  }
  func.func @transform_0(%arg0: i32) -> (i32, i32) {
    %c0_i32 = arith.constant 0 : i32
    %c0_i32_0 = arith.constant 0 : i32
    %c0_i32_1 = arith.constant 0 : i32
    return %c0_i32, %c0_i32_0 : i32, i32
  }
  func.func @transform_1(%arg0: i32) -> (i32, i32) {
    %c0_i32 = arith.constant 0 : i32
    %c0_i32_0 = arith.constant 0 : i32
    return %arg0, %c0_i32 : i32, i32
  }
  func.func @transform_2(%arg0: i32) -> (i32, i32) {
    %c0_i32 = arith.constant 0 : i32
    %c0_i32_0 = arith.constant 0 : i32
    return %arg0, %c0_i32 : i32, i32
  }
  func.func @transform_3(%arg0: i32) -> (i32, i32) {
    %c0_i32 = arith.constant 0 : i32
    %c0_i32_0 = arith.constant 0 : i32
    return %arg0, %c0_i32 : i32, i32
  }
  func.func @transform_4(%arg0: i32) -> (i32, i32) {
    %c0_i32 = arith.constant 0 : i32
    %c0_i32_0 = arith.constant 0 : i32
    return %arg0, %c0_i32 : i32, i32
  }
}

</mosaic_0001>

<llo_original>
// kernel: tpu_custom_call.1
$region0: #{tpu_custom_call.1}
  #allocation0 [shape = 'u32[]', space=smem, size = 0x4, offset = 0x4, fixed_abs, tag = 'smem constant byte address 0x4 - core index']
  #allocation1 [shape = 'u32[144,128]{1,0:T(1,128)}', space=vmem, size = 0x12000, scoped, tag = 'internal scratch']
  %s0 = inlined_call_operand.vmem [shape: f32[128,128], index: 0, kind: input, shape index: {}]
  %s1 = inlined_call_operand.vmem [shape: s32[64,16], index: 1, kind: input, shape index: {}]
  %s2 = inlined_call_operand.vmem [shape: f32[64,16], index: 2, kind: input, shape index: {}]
  %s3 = inlined_call_operand.vmem [shape: s32[64,6], index: 3, kind: input, shape index: {}]
  %s4 = inlined_call_operand.vmem [shape: f32[64,6], index: 4, kind: output, shape index: {}]
  %s5 = sld [smem:[#allocation0]]
  $region49: #{tpu_custom_call.1} parent=0
    _
  %s7 = ssub.s32 1, %s5
  %s8 = scalar_select 0, %s7, %s5
  loop: start=0, step=1, limit=4
  $region2: #{tpu_custom_call.1} parent=0 // loop_pre_header
    _
  $region3: #{tpu_custom_call.1} parent=0 // loop_header
    %s10 = sphi 0, %s14
    %p11 = scmp.ge.s32.totalorder %s10, 4
    %s18 = sphi 0, %s18
    %s20 = sphi 0, %s18
    %s21 = sphi 0, %s20
    %s35 = sphi 0, %s21
    %s41 = sphi 0, %s43
    %s44 = sphi 0, %s41
    %s45 = sphi 0, %s44
    %s61 = sphi 0, %s45
    %s67 = sphi 0, %s69
    %s70 = sphi 0, %s67
    %s71 = sphi 0, %s70
    %s87 = sphi 0, %s71
    %s93 = sphi 0, %s95
    %s96 = sphi 0, %s93
    %s97 = sphi 0, %s96
    %s113 = sphi 0, %s97
    %s119 = sphi 0, %s121
    %s122 = sphi 0, %s119
    %s123 = sphi 0, %s122
    %s139 = sphi 0, %s123
  $region4: #{tpu_custom_call.1} parent=0 // loop_header_branch
    %13 = sbr.rel (%p11) target = $region8
  $region5: #{tpu_custom_call.1} parent=0 // loop_body
    %s15 = ssub.s32 %s10, 1
    %s16 = ssub.s32 %s10, 2
    %s17 = sadd.s32 %s10, 1
    %s19 = sadd.s32 %s18, 1
    %p22 = scmp.eq.s32.totalorder %s10, 1
    %p23 = scmp.ne.s32.totalorder %s18, %s20
    %p24 = scmp.eq.s32.totalorder %s10, 0
    %p25 = por %p23, %p24
    %p26 = scmp.ne.s32.totalorder %s18, %s20
    %p27 = scmp.eq.s32.totalorder %s15, 1
    %p28 = por %p26, %p27
    %p29 = scmp.ne.s32.totalorder %s20, %s21
    %p30 = scmp.eq.s32.totalorder %s15, 0
    %p31 = por %p29, %p30
    %p32 = scmp.ne.s32.totalorder %s20, %s21
    %p33 = scmp.eq.s32.totalorder %s16, 1
    %p34 = por %p32, %p33
    %p36 = scmp.ne.s32.totalorder %s21, %s35
    %p37 = scmp.eq.s32.totalorder %s16, 0
    %p38 = por %p36, %p37
    %s39 = ssub.s32 %s10, %s17
    %p40 = scmp.eq.s32.totalorder %s39, 0
    %s42 = sadd.s32 %s41, 1
    %s43 = scalar_select %p40, %s41, %s42
    %p46 = pneg %p40
    %p47 = scmp.eq.s32.totalorder %s10, 1
    %p48 = por %p46, %p47
    %p49 = scmp.ne.s32.totalorder %s41, %s44
    %p50 = scmp.eq.s32.totalorder %s10, 0
    %p51 = por %p49, %p50
    %p52 = scmp.ne.s32.totalorder %s41, %s44
    %p53 = scmp.eq.s32.totalorder %s15, 1
    %p54 = por %p52, %p53
    %p55 = scmp.ne.s32.totalorder %s44, %s45
    %p56 = scmp.eq.s32.totalorder %s15, 0
    %p57 = por %p55, %p56
    %p58 = scmp.ne.s32.totalorder %s44, %s45
    %p59 = scmp.eq.s32.totalorder %s16, 1
    %p60 = por %p58, %p59
    %p62 = scmp.ne.s32.totalorder %s45, %s61
    %p63 = scmp.eq.s32.totalorder %s16, 0
    %p64 = por %p62, %p63
    %s65 = ssub.s32 %s10, %s17
    %p66 = scmp.eq.s32.totalorder %s65, 0
    %s68 = sadd.s32 %s67, 1
    %s69 = scalar_select %p66, %s67, %s68
    %p72 = pneg %p66
    %p73 = scmp.eq.s32.totalorder %s10, 1
    %p74 = por %p72, %p73
    %p75 = scmp.ne.s32.totalorder %s67, %s70
    %p76 = scmp.eq.s32.totalorder %s10, 0
    %p77 = por %p75, %p76
    %p78 = scmp.ne.s32.totalorder %s67, %s70
    %p79 = scmp.eq.s32.totalorder %s15, 1
    %p80 = por %p78, %p79
    %p81 = scmp.ne.s32.totalorder %s70, %s71
    %p82 = scmp.eq.s32.totalorder %s15, 0
    %p83 = por %p81, %p82
    %p84 = scmp.ne.s32.totalorder %s70, %s71
    %p85 = scmp.eq.s32.totalorder %s16, 1
    %p86 = por %p84, %p85
    %p88 = scmp.ne.s32.totalorder %s71, %s87
    %p89 = scmp.eq.s32.totalorder %s16, 0
    %p90 = por %p88, %p89
    %s91 = ssub.s32 %s10, %s17
    %p92 = scmp.eq.s32.totalorder %s91, 0
    %s94 = sadd.s32 %s93, 1
    %s95 = scalar_select %p92, %s93, %s94
    %p98 = pneg %p92
    %p99 = scmp.eq.s32.totalorder %s10, 1
    %p100 = por %p98, %p99
    %p101 = scmp.ne.s32.totalorder %s93, %s96
    %p102 = scmp.eq.s32.totalorder %s10, 0
    %p103 = por %p101, %p102
    %p104 = scmp.ne.s32.totalorder %s93, %s96
    %p105 = scmp.eq.s32.totalorder %s15, 1
    %p106 = por %p104, %p105
    %p107 = scmp.ne.s32.totalorder %s96, %s97
    %p108 = scmp.eq.s32.totalorder %s15, 0
    %p109 = por %p107, %p108
    %p110 = scmp.ne.s32.totalorder %s96, %s97
    %p111 = scmp.eq.s32.totalorder %s16, 1
    %p112 = por %p110, %p111
    %p114 = scmp.ne.s32.totalorder %s97, %s113
    %p115 = scmp.eq.s32.totalorder %s16, 0
    %p116 = por %p114, %p115
    %s117 = ssub.s32 %s10, %s17
    %p118 = scmp.eq.s32.totalorder %s117, 0
    %s120 = sadd.s32 %s119, 1
    %s121 = scalar_select %p118, %s119, %s120
    %p124 = pneg %p118
    %p125 = scmp.eq.s32.totalorder %s10, 1
    %p126 = por %p124, %p125
    %p127 = scmp.ne.s32.totalorder %s119, %s122
    %p128 = scmp.eq.s32.totalorder %s10, 0
    %p129 = por %p127, %p128
    %p130 = scmp.ne.s32.totalorder %s119, %s122
    %p131 = scmp.eq.s32.totalorder %s15, 1
    %p132 = por %p130, %p131
    %p133 = scmp.ne.s32.totalorder %s122, %s123
    %p134 = scmp.eq.s32.totalorder %s15, 0
    %p135 = por %p133, %p134
    %p136 = scmp.ne.s32.totalorder %s122, %s123
    %p137 = scmp.eq.s32.totalorder %s16, 1
    %p138 = por %p136, %p137
    %p140 = scmp.ne.s32.totalorder %s123, %s139
    %p141 = scmp.eq.s32.totalorder %s16, 0
    %p142 = por %p140, %p141
    %p143 = scmp.le.s32.totalorder 1, %s10
    %p144 = scmp.lt.s32.totalorder %s10, 3
    %p145 = pnand %p143, %p144
    %p146 = pneg %p145
    // Predicated region
    $region9: #{tpu_custom_call.1} parent=5 // pred_check
      _
    $region10: #{tpu_custom_call.1} parent=5 // pred_check_branch
      %148 = sbr.rel (%p145) target = $region12
    $region11: #{tpu_custom_call.1} parent=5 // pred_region
      %s149 = ssub.s32 %s10, 1
      // Predicated region
      $region13: #{tpu_custom_call.1} parent=11 // pred_check
        %p150 = pneg %p31
      $region14: #{tpu_custom_call.1} parent=11 // pred_check_branch
        %152 = sbr.rel (%p150) target = $region16
      $region15: #{tpu_custom_call.1} parent=11 // pred_region
        _
      $region16: #{tpu_custom_call.1} parent=11 // pred_fallthru
        _
    $region12: #{tpu_custom_call.1} parent=5 // pred_fallthru
      _
    %p153 = scmp.lt.s32.totalorder %s10, 2
    // Predicated region
    $region17: #{tpu_custom_call.1} parent=5 // pred_check
      %p154 = pneg %p153
    $region18: #{tpu_custom_call.1} parent=5 // pred_check_branch
      %156 = sbr.rel (%p154) target = $region20
    $region19: #{tpu_custom_call.1} parent=5 // pred_region
      // Predicated region
      $region21: #{tpu_custom_call.1} parent=19 // pred_check
        %p157 = pneg %p51
      $region22: #{tpu_custom_call.1} parent=19 // pred_check_branch
        %159 = sbr.rel (%p157) target = $region24
      $region23: #{tpu_custom_call.1} parent=19 // pred_region
        %s160 = smul.u32 4, %s10
        %p161 = scmp.lt.s32.totalorder %s160, 7
        %s162 = scalar_select %p161, %s160, 7
        %s163 = smul.addr %s162, 8
        %s164 = scalar_lea.vmem %s1, %s163
        %s165 = smul.u32 4, %s10
      $region24: #{tpu_custom_call.1} parent=19 // pred_fallthru
        _
      // Predicated region
      $region25: #{tpu_custom_call.1} parent=19 // pred_check
        %p166 = pneg %p77
      $region26: #{tpu_custom_call.1} parent=19 // pred_check_branch
        %168 = sbr.rel (%p166) target = $region28
      $region27: #{tpu_custom_call.1} parent=19 // pred_region
        %s169 = smul.u32 4, %s10
        %p170 = scmp.lt.s32.totalorder %s169, 7
        %s171 = scalar_select %p170, %s169, 7
        %s172 = smul.addr %s171, 8
        %s173 = scalar_lea.vmem %s2, %s172
        %s174 = smul.u32 4, %s10
      $region28: #{tpu_custom_call.1} parent=19 // pred_fallthru
        _
      // Predicated region
      $region29: #{tpu_custom_call.1} parent=19 // pred_check
        %p175 = pneg %p103
      $region30: #{tpu_custom_call.1} parent=19 // pred_check_branch
        %177 = sbr.rel (%p175) target = $region32
      $region31: #{tpu_custom_call.1} parent=19 // pred_region
        %s178 = smul.u32 4, %s10
        %p179 = scmp.lt.s32.totalorder %s178, 7
        %s180 = scalar_select %p179, %s178, 7
        %s181 = smul.addr %s180, 8
        %s182 = scalar_lea.vmem %s3, %s181
        %s183 = smul.u32 4, %s10
      $region32: #{tpu_custom_call.1} parent=19 // pred_fallthru
        _
    $region20: #{tpu_custom_call.1} parent=5 // pred_fallthru
      _
    %p184 = scmp.le.s32.totalorder 1, %s10
    %p185 = scmp.lt.s32.totalorder %s10, 3
    %p186 = pnand %p184, %p185
    %p187 = pneg %p186
    // Predicated region
    $region33: #{tpu_custom_call.1} parent=5 // pred_check
      _
    $region34: #{tpu_custom_call.1} parent=5 // pred_check_branch
      %189 = sbr.rel (%p186) target = $region36
    $region35: #{tpu_custom_call.1} parent=5 // pred_region
      %s190 = ssub.s32 %s10, 1
      %p191 = pneg %p31
      %p192 = pneg %p28
      %s193 = smul.u32 4, %s15
      %p194 = scmp.lt.s32.totalorder %s193, 7
      %s195 = scalar_select %p194, %s193, 7
      %s196 = smul.addr %s195, 8
      %s197 = scalar_lea.vmem %s1, %s196
      %p198 = pneg %p57
      %p199 = pneg %p54
      %s200 = smul.u32 4, %s15
      %p201 = scmp.lt.s32.totalorder %s200, 7
      %s202 = scalar_select %p201, %s200, 7
      %s203 = smul.addr %s202, 8
      %s204 = scalar_lea.vmem %s2, %s203
      %p205 = pneg %p83
      %p206 = pneg %p80
      %s207 = smul.u32 4, %s15
      %p208 = scmp.lt.s32.totalorder %s207, 7
      %s209 = scalar_select %p208, %s207, 7
      %s210 = smul.addr %s209, 8
      %s211 = scalar_lea.vmem %s3, %s210
      %p212 = pneg %p109
      %p213 = pneg %p106
      %p214 = pneg %p135
      %p215 = pneg %p132
      %s216 = smul.u32 4, %s15
      %p217 = scmp.lt.s32.totalorder %s216, 7
      %s218 = scalar_select %p217, %s216, 7
      %s219 = smul.addr %s218, 8
      %s220 = scalar_lea.vmem %s4, %s219
      %s221 = smul.u32 4, %s15
      %p222 = scmp.lt.s32.totalorder %s221, 7
      %s223 = scalar_select %p222, %s221, 7
      %s224 = smul.addr %s223, 8
      %s225 = scalar_lea.vmem %s1, %s224
      %s226 = smul.u32 4, %s15
      %s227 = smul.u32 4, %s15
      %p228 = scmp.lt.s32.totalorder %s227, 7
      %s229 = scalar_select %p228, %s227, 7
      %s230 = smul.addr %s229, 8
      %s231 = scalar_lea.vmem %s2, %s230
      %s232 = smul.u32 4, %s15
      %s233 = smul.u32 4, %s15
      %p234 = scmp.lt.s32.totalorder %s233, 7
      %s235 = scalar_select %p234, %s233, 7
      %s236 = smul.addr %s235, 8
      %s237 = scalar_lea.vmem %s3, %s236
      %s238 = smul.u32 4, %s15
      %s239 = smul.u32 4, %s15
      %p240 = scmp.lt.s32.totalorder %s239, 7
      %s241 = scalar_select %p240, %s239, 7
      %s242 = smul.addr %s241, 8
      %s243 = scalar_lea.vmem %s4, %s242
      %s244 = smul.u32 4, %s15
      %v245 = vld [vmem:[%s0] sm:$0xff]
      %v246 = vld [vmem:[%s0 + $0x8] sm:$0xff]
      %v247 = vld [vmem:[%s0 + $0x10] sm:$0xff]
      %v248 = vld [vmem:[%s0 + $0x18] sm:$0xff]
      %v249 = vld [vmem:[%s0 + $0x20] sm:$0xff]
      %v250 = vld [vmem:[%s0 + $0x28] sm:$0xff]
      %v251 = vld [vmem:[%s0 + $0x30] sm:$0xff]
      %v252 = vld [vmem:[%s0 + $0x38] sm:$0xff]
      %v253 = vld [vmem:[%s0 + $0x40] sm:$0xff]
      %v254 = vld [vmem:[%s0 + $0x48] sm:$0xff]
      %v255 = vld [vmem:[%s0 + $0x50] sm:$0xff]
      %v256 = vld [vmem:[%s0 + $0x58] sm:$0xff]
      %v257 = vld [vmem:[%s0 + $0x60] sm:$0xff]
      %v258 = vld [vmem:[%s0 + $0x68] sm:$0xff]
      %v259 = vld [vmem:[%s0 + $0x70] sm:$0xff]
      %v260 = vld [vmem:[%s0 + $0x78] sm:$0xff]
      %v261 = vld [vmem:[%s225] sm:$0xff]
      %v262 = vld [vmem:[%s225 + $0x8] sm:$0xff]
      %v263 = vld [vmem:[%s225 + $0x10] sm:$0xff]
      %v264 = vld [vmem:[%s225 + $0x18] sm:$0xff]
      %v265 = vld [vmem:[%s231] sm:$0xff]
      %v266 = vld [vmem:[%s231 + $0x8] sm:$0xff]
      %v267 = vld [vmem:[%s231 + $0x10] sm:$0xff]
      %v268 = vld [vmem:[%s231 + $0x18] sm:$0xff]
      %v269 = vld [vmem:[%s237] sm:$0xff]
      %v270 = vld [vmem:[%s237 + $0x8] sm:$0xff]
      %v271 = vld [vmem:[%s237 + $0x10] sm:$0xff]
      %v272 = vld [vmem:[%s237 + $0x18] sm:$0xff]
      %v273 = vlaneseq
      %v274 = vand.u32 %v273, 127
      %275 = vset.pattern.permute.xlu0 0
      %276 = vperm.xlu0 %275, %v261
      %v277 = vpop.permute.xlu0 %276
      %278 = vset.pattern.permute.xlu0 0
      %279 = vperm.xlu0 %278, %v262
      %v280 = vpop.permute.xlu0 %279
      %281 = vset.pattern.permute.xlu0 0
      %282 = vperm.xlu0 %281, %v263
      %v283 = vpop.permute.xlu0 %282
      %284 = vset.pattern.permute.xlu0 0
      %285 = vperm.xlu0 %284, %v264
      %v286 = vpop.permute.xlu0 %285
      %vm287 = vcmp.eq.s32.totalorder %v277, %v274
      %vm288 = vcmp.eq.s32.totalorder %v280, %v274
      %vm289 = vcmp.eq.s32.totalorder %v283, %v274
      %vm290 = vcmp.eq.s32.totalorder %v286, %v274
      %v291 = vsel %vm287, 1, 0
      %v292 = vsel %vm288, 1, 0
      %v293 = vsel %vm289, 1, 0
      %v294 = vsel %vm290, 1, 0
      %v295 = vcvt.s32.f32 %v291
      %v296 = vcvt.s32.f32 %v292
      %v297 = vcvt.s32.f32 %v293
      %v298 = vcvt.s32.f32 %v294
      %300 = vset.pattern.permute.xlu0 0
      %301 = vperm.xlu0 %300, %v265
      %v302 = vpop.permute.xlu0 %301
      %305 = vset.pattern.permute.xlu0 0
      %306 = vperm.xlu0 %305, %v266
      %v307 = vpop.permute.xlu0 %306
      %310 = vset.pattern.permute.xlu0 0
      %311 = vperm.xlu0 %310, %v267
      %v312 = vpop.permute.xlu0 %311
      %315 = vset.pattern.permute.xlu0 0
      %316 = vperm.xlu0 %315, %v268
      %v317 = vpop.permute.xlu0 %316
      %v319 = vmul.f32 %v302, %v295
      %v320 = vmul.f32 %v307, %v296
      %v321 = vmul.f32 %v312, %v297
      %v322 = vmul.f32 %v317, %v298
      %v323 = vadd.f32 %v319, 0.0
      %v324 = vadd.f32 %v320, 0.0
      %v325 = vadd.f32 %v321, 0.0
      %v326 = vadd.f32 %v322, 0.0
      %327 = vset.pattern.permute.xlu0 1
      %328 = vperm.xlu0 %327, %v261
      %v329 = vpop.permute.xlu0 %328
      %330 = vset.pattern.permute.xlu0 1
      %331 = vperm.xlu0 %330, %v262
      %v332 = vpop.permute.xlu0 %331
      %333 = vset.pattern.permute.xlu0 1
      %334 = vperm.xlu0 %333, %v263
      %v335 = vpop.permute.xlu0 %334
      %336 = vset.pattern.permute.xlu0 1
      %337 = vperm.xlu0 %336, %v264
      %v338 = vpop.permute.xlu0 %337
      %vm339 = vcmp.eq.s32.totalorder %v329, %v274
      %vm340 = vcmp.eq.s32.totalorder %v332, %v274
      %vm341 = vcmp.eq.s32.totalorder %v335, %v274
      %vm342 = vcmp.eq.s32.totalorder %v338, %v274
      %v343 = vsel %vm339, 1, 0
      %v344 = vsel %vm340, 1, 0
      %v345 = vsel %vm341, 1, 0
      %v346 = vsel %vm342, 1, 0
      %v347 = vcvt.s32.f32 %v343
      %v348 = vcvt.s32.f32 %v344
      %v349 = vcvt.s32.f32 %v345
      %v350 = vcvt.s32.f32 %v346
      %351 = vset.pattern.permute.xlu0 1
      %352 = vperm.xlu0 %351, %v265
      %v353 = vpop.permute.xlu0 %352
      %355 = vset.pattern.permute.xlu0 1
      %356 = vperm.xlu0 %355, %v266
      %v357 = vpop.permute.xlu0 %356
      %359 = vset.pattern.permute.xlu0 1
      %360 = vperm.xlu0 %359, %v267
      %v361 = vpop.permute.xlu0 %360
      %363 = vset.pattern.permute.xlu0 1
      %364 = vperm.xlu0 %363, %v268
      %v365 = vpop.permute.xlu0 %364
      %v367 = vmul.f32 %v353, %v347
      %v368 = vmul.f32 %v357, %v348
      %v369 = vmul.f32 %v361, %v349
      %v370 = vmul.f32 %v365, %v350
      %v371 = vadd.f32 %v323, %v367
      %v372 = vadd.f32 %v324, %v368
      %v373 = vadd.f32 %v325, %v369
      %v374 = vadd.f32 %v326, %v370
      %375 = vset.pattern.permute.xlu0 2
      %376 = vperm.xlu0 %375, %v261
      %v377 = vpop.permute.xlu0 %376
      %378 = vset.pattern.permute.xlu0 2
      %379 = vperm.xlu0 %378, %v262
      %v380 = vpop.permute.xlu0 %379
      %381 = vset.pattern.permute.xlu0 2
      %382 = vperm.xlu0 %381, %v263
      %v383 = vpop.permute.xlu0 %382
      %384 = vset.pattern.permute.xlu0 2
      %385 = vperm.xlu0 %384, %v264
      %v386 = vpop.permute.xlu0 %385
      %vm387 = vcmp.eq.s32.totalorder %v377, %v274
      %vm388 = vcmp.eq.s32.totalorder %v380, %v274
      %vm389 = vcmp.eq.s32.totalorder %v383, %v274
      %vm390 = vcmp.eq.s32.totalorder %v386, %v274
      %v391 = vsel %vm387, 1, 0
      %v392 = vsel %vm388, 1, 0
      %v393 = vsel %vm389, 1, 0
      %v394 = vsel %vm390, 1, 0
      %v395 = vcvt.s32.f32 %v391
      %v396 = vcvt.s32.f32 %v392
      %v397 = vcvt.s32.f32 %v393
      %v398 = vcvt.s32.f32 %v394
      %399 = vset.pattern.permute.xlu0 2
      %400 = vperm.xlu0 %399, %v265
      %v401 = vpop.permute.xlu0 %400
      %403 = vset.pattern.permute.xlu0 2
      %404 = vperm.xlu0 %403, %v266
      %v405 = vpop.permute.xlu0 %404
      %407 = vset.pattern.permute.xlu0 2
      %408 = vperm.xlu0 %407, %v267
      %v409 = vpop.permute.xlu0 %408
      %411 = vset.pattern.permute.xlu0 2
      %412 = vperm.xlu0 %411, %v268
      %v413 = vpop.permute.xlu0 %412
      %v415 = vmul.f32 %v401, %v395
      %v416 = vmul.f32 %v405, %v396
      %v417 = vmul.f32 %v409, %v397
      %v418 = vmul.f32 %v413, %v398
      %v419 = vadd.f32 %v371, %v415
      %v420 = vadd.f32 %v372, %v416
      %v421 = vadd.f32 %v373, %v417
      %v422 = vadd.f32 %v374, %v418
      %423 = vset.pattern.permute.xlu0 3
      %424 = vperm.xlu0 %423, %v261
      %v425 = vpop.permute.xlu0 %424
      %426 = vset.pattern.permute.xlu0 3
      %427 = vperm.xlu0 %426, %v262
      %v428 = vpop.permute.xlu0 %427
      %429 = vset.pattern.permute.xlu0 3
      %430 = vperm.xlu0 %429, %v263
      %v431 = vpop.permute.xlu0 %430
      %432 = vset.pattern.permute.xlu0 3
      %433 = vperm.xlu0 %432, %v264
      %v434 = vpop.permute.xlu0 %433
      %vm435 = vcmp.eq.s32.totalorder %v425, %v274
      %vm436 = vcmp.eq.s32.totalorder %v428, %v274
      %vm437 = vcmp.eq.s32.totalorder %v431, %v274
      %vm438 = vcmp.eq.s32.totalorder %v434, %v274
      %v439 = vsel %vm435, 1, 0
      %v440 = vsel %vm436, 1, 0
      %v441 = vsel %vm437, 1, 0
      %v442 = vsel %vm438, 1, 0
      %v443 = vcvt.s32.f32 %v439
      %v444 = vcvt.s32.f32 %v440
      %v445 = vcvt.s32.f32 %v441
      %v446 = vcvt.s32.f32 %v442
      %447 = vset.pattern.permute.xlu0 3
      %448 = vperm.xlu0 %447, %v265
      %v449 = vpop.permute.xlu0 %448
      %451 = vset.pattern.permute.xlu0 3
      %452 = vperm.xlu0 %451, %v266
      %v453 = vpop.permute.xlu0 %452
      %455 = vset.pattern.permute.xlu0 3
      %456 = vperm.xlu0 %455, %v267
      %v457 = vpop.permute.xlu0 %456
      %459 = vset.pattern.permute.xlu0 3
      %460 = vperm.xlu0 %459, %v268
      %v461 = vpop.permute.xlu0 %460
      %v463 = vmul.f32 %v449, %v443
      %v464 = vmul.f32 %v453, %v444
      %v465 = vmul.f32 %v457, %v445
      %v466 = vmul.f32 %v461, %v446
      %v467 = vadd.f32 %v419, %v463
      %v468 = vadd.f32 %v420, %v464
      %v469 = vadd.f32 %v421, %v465
      %v470 = vadd.f32 %v422, %v466
      %471 = vset.pattern.permute.xlu0 4
      %472 = vperm.xlu0 %471, %v261
      %v473 = vpop.permute.xlu0 %472
      %474 = vset.pattern.permute.xlu0 4
      %475 = vperm.xlu0 %474, %v262
      %v476 = vpop.permute.xlu0 %475
      %477 = vset.pattern.permute.xlu0 4
      %478 = vperm.xlu0 %477, %v263
      %v479 = vpop.permute.xlu0 %478
      %480 = vset.pattern.permute.xlu0 4
      %481 = vperm.xlu0 %480, %v264
      %v482 = vpop.permute.xlu0 %481
      %vm483 = vcmp.eq.s32.totalorder %v473, %v274
      %vm484 = vcmp.eq.s32.totalorder %v476, %v274
      %vm485 = vcmp.eq.s32.totalorder %v479, %v274
      %vm486 = vcmp.eq.s32.totalorder %v482, %v274
      %v487 = vsel %vm483, 1, 0
      %v488 = vsel %vm484, 1, 0
      %v489 = vsel %vm485, 1, 0
      %v490 = vsel %vm486, 1, 0
      %v491 = vcvt.s32.f32 %v487
      %v492 = vcvt.s32.f32 %v488
      %v493 = vcvt.s32.f32 %v489
      %v494 = vcvt.s32.f32 %v490
      %495 = vset.pattern.permute.xlu0 4
      %496 = vperm.xlu0 %495, %v265
      %v497 = vpop.permute.xlu0 %496
      %499 = vset.pattern.permute.xlu0 4
      %500 = vperm.xlu0 %499, %v266
      %v501 = vpop.permute.xlu0 %500
      %503 = vset.pattern.permute.xlu0 4
      %504 = vperm.xlu0 %503, %v267
      %v505 = vpop.permute.xlu0 %504
      %507 = vset.pattern.permute.xlu0 4
      %508 = vperm.xlu0 %507, %v268
      %v509 = vpop.permute.xlu0 %508
      %v511 = vmul.f32 %v497, %v491
      %v512 = vmul.f32 %v501, %v492
      %v513 = vmul.f32 %v505, %v493
      %v514 = vmul.f32 %v509, %v494
      %v515 = vadd.f32 %v467, %v511
      %v516 = vadd.f32 %v468, %v512
      %v517 = vadd.f32 %v469, %v513
      %v518 = vadd.f32 %v470, %v514
      %519 = vset.pattern.permute.xlu0 5
      %520 = vperm.xlu0 %519, %v261
      %v521 = vpop.permute.xlu0 %520
      %522 = vset.pattern.permute.xlu0 5
      %523 = vperm.xlu0 %522, %v262
      %v524 = vpop.permute.xlu0 %523
      %525 = vset.pattern.permute.xlu0 5
      %526 = vperm.xlu0 %525, %v263
      %v527 = vpop.permute.xlu0 %526
      %528 = vset.pattern.permute.xlu0 5
      %529 = vperm.xlu0 %528, %v264
      %v530 = vpop.permute.xlu0 %529
      %vm531 = vcmp.eq.s32.totalorder %v521, %v274
      %vm532 = vcmp.eq.s32.totalorder %v524, %v274
      %vm533 = vcmp.eq.s32.totalorder %v527, %v274
      %vm534 = vcmp.eq.s32.totalorder %v530, %v274
      %v535 = vsel %vm531, 1, 0
      %v536 = vsel %vm532, 1, 0
      %v537 = vsel %vm533, 1, 0
      %v538 = vsel %vm534, 1, 0
      %v539 = vcvt.s32.f32 %v535
      %v540 = vcvt.s32.f32 %v536
      %v541 = vcvt.s32.f32 %v537
      %v542 = vcvt.s32.f32 %v538
      %543 = vset.pattern.permute.xlu0 5
      %544 = vperm.xlu0 %543, %v265
      %v545 = vpop.permute.xlu0 %544
      %547 = vset.pattern.permute.xlu0 5
      %548 = vperm.xlu0 %547, %v266
      %v549 = vpop.permute.xlu0 %548
      %551 = vset.pattern.permute.xlu0 5
      %552 = vperm.xlu0 %551, %v267
      %v553 = vpop.permute.xlu0 %552
      %555 = vset.pattern.permute.xlu0 5
      %556 = vperm.xlu0 %555, %v268
      %v557 = vpop.permute.xlu0 %556
      %v559 = vmul.f32 %v545, %v539
      %v560 = vmul.f32 %v549, %v540
      %v561 = vmul.f32 %v553, %v541
      %v562 = vmul.f32 %v557, %v542
      %v563 = vadd.f32 %v515, %v559
      %v564 = vadd.f32 %v516, %v560
      %v565 = vadd.f32 %v517, %v561
      %v566 = vadd.f32 %v518, %v562
      %567 = vset.pattern.permute.xlu0 6
      %568 = vperm.xlu0 %567, %v261
      %v569 = vpop.permute.xlu0 %568
      %570 = vset.pattern.permute.xlu0 6
      %571 = vperm.xlu0 %570, %v262
      %v572 = vpop.permute.xlu0 %571
      %573 = vset.pattern.permute.xlu0 6
      %574 = vperm.xlu0 %573, %v263
      %v575 = vpop.permute.xlu0 %574
      %576 = vset.pattern.permute.xlu0 6
      %577 = vperm.xlu0 %576, %v264
      %v578 = vpop.permute.xlu0 %577
      %vm579 = vcmp.eq.s32.totalorder %v569, %v274
      %vm580 = vcmp.eq.s32.totalorder %v572, %v274
      %vm581 = vcmp.eq.s32.totalorder %v575, %v274
      %vm582 = vcmp.eq.s32.totalorder %v578, %v274
      %v583 = vsel %vm579, 1, 0
      %v584 = vsel %vm580, 1, 0
      %v585 = vsel %vm581, 1, 0
      %v586 = vsel %vm582, 1, 0
      %v587 = vcvt.s32.f32 %v583
      %v588 = vcvt.s32.f32 %v584
      %v589 = vcvt.s32.f32 %v585
      %v590 = vcvt.s32.f32 %v586
      %591 = vset.pattern.permute.xlu0 6
      %592 = vperm.xlu0 %591, %v265
      %v593 = vpop.permute.xlu0 %592
      %595 = vset.pattern.permute.xlu0 6
      %596 = vperm.xlu0 %595, %v266
      %v597 = vpop.permute.xlu0 %596
      %599 = vset.pattern.permute.xlu0 6
      %600 = vperm.xlu0 %599, %v267
      %v601 = vpop.permute.xlu0 %600
      %603 = vset.pattern.permute.xlu0 6
      %604 = vperm.xlu0 %603, %v268
      %v605 = vpop.permute.xlu0 %604
      %v607 = vmul.f32 %v593, %v587
      %v608 = vmul.f32 %v597, %v588
      %v609 = vmul.f32 %v601, %v589
      %v610 = vmul.f32 %v605, %v590
      %v611 = vadd.f32 %v563, %v607
      %v612 = vadd.f32 %v564, %v608
      %v613 = vadd.f32 %v565, %v609
      %v614 = vadd.f32 %v566, %v610
      %615 = vset.pattern.permute.xlu0 7
      %616 = vperm.xlu0 %615, %v261
      %v617 = vpop.permute.xlu0 %616
      %618 = vset.pattern.permute.xlu0 7
      %619 = vperm.xlu0 %618, %v262
      %v620 = vpop.permute.xlu0 %619
      %621 = vset.pattern.permute.xlu0 7
      %622 = vperm.xlu0 %621, %v263
      %v623 = vpop.permute.xlu0 %622
      %624 = vset.pattern.permute.xlu0 7
      %625 = vperm.xlu0 %624, %v264
      %v626 = vpop.permute.xlu0 %625
      %vm627 = vcmp.eq.s32.totalorder %v617, %v274
      %vm628 = vcmp.eq.s32.totalorder %v620, %v274
      %vm629 = vcmp.eq.s32.totalorder %v623, %v274
      %vm630 = vcmp.eq.s32.totalorder %v626, %v274
      %v631 = vsel %vm627, 1, 0
      %v632 = vsel %vm628, 1, 0
      %v633 = vsel %vm629, 1, 0
      %v634 = vsel %vm630, 1, 0
      %v635 = vcvt.s32.f32 %v631
      %v636 = vcvt.s32.f32 %v632
      %v637 = vcvt.s32.f32 %v633
      %v638 = vcvt.s32.f32 %v634
      %639 = vset.pattern.permute.xlu0 7
      %640 = vperm.xlu0 %639, %v265
      %v641 = vpop.permute.xlu0 %640
      %643 = vset.pattern.permute.xlu0 7
      %644 = vperm.xlu0 %643, %v266
      %v645 = vpop.permute.xlu0 %644
      %647 = vset.pattern.permute.xlu0 7
      %648 = vperm.xlu0 %647, %v267
      %v649 = vpop.permute.xlu0 %648
      %651 = vset.pattern.permute.xlu0 7
      %652 = vperm.xlu0 %651, %v268
      %v653 = vpop.permute.xlu0 %652
      %v655 = vmul.f32 %v641, %v635
      %v656 = vmul.f32 %v645, %v636
      %v657 = vmul.f32 %v649, %v637
      %v658 = vmul.f32 %v653, %v638
      %v659 = vadd.f32 %v611, %v655
      %v660 = vadd.f32 %v612, %v656
      %v661 = vadd.f32 %v613, %v657
      %v662 = vadd.f32 %v614, %v658
      %663 = vset.pattern.permute.xlu0 8
      %664 = vperm.xlu0 %663, %v261
      %v665 = vpop.permute.xlu0 %664
      %666 = vset.pattern.permute.xlu0 8
      %667 = vperm.xlu0 %666, %v262
      %v668 = vpop.permute.xlu0 %667
      %669 = vset.pattern.permute.xlu0 8
      %670 = vperm.xlu0 %669, %v263
      %v671 = vpop.permute.xlu0 %670
      %672 = vset.pattern.permute.xlu0 8
      %673 = vperm.xlu0 %672, %v264
      %v674 = vpop.permute.xlu0 %673
      %vm675 = vcmp.eq.s32.totalorder %v665, %v274
      %vm676 = vcmp.eq.s32.totalorder %v668, %v274
      %vm677 = vcmp.eq.s32.totalorder %v671, %v274
      %vm678 = vcmp.eq.s32.totalorder %v674, %v274
      %v679 = vsel %vm675, 1, 0
      %v680 = vsel %vm676, 1, 0
      %v681 = vsel %vm677, 1, 0
      %v682 = vsel %vm678, 1, 0
      %v683 = vcvt.s32.f32 %v679
      %v684 = vcvt.s32.f32 %v680
      %v685 = vcvt.s32.f32 %v681
      %v686 = vcvt.s32.f32 %v682
      %687 = vset.pattern.permute.xlu0 8
      %688 = vperm.xlu0 %687, %v265
      %v689 = vpop.permute.xlu0 %688
      %691 = vset.pattern.permute.xlu0 8
      %692 = vperm.xlu0 %691, %v266
      %v693 = vpop.permute.xlu0 %692
      %695 = vset.pattern.permute.xlu0 8
      %696 = vperm.xlu0 %695, %v267
      %v697 = vpop.permute.xlu0 %696
      %699 = vset.pattern.permute.xlu0 8
      %700 = vperm.xlu0 %699, %v268
      %v701 = vpop.permute.xlu0 %700
      %v703 = vmul.f32 %v689, %v683
      %v704 = vmul.f32 %v693, %v684
      %v705 = vmul.f32 %v697, %v685
      %v706 = vmul.f32 %v701, %v686
      %v707 = vadd.f32 %v659, %v703
      %v708 = vadd.f32 %v660, %v704
      %v709 = vadd.f32 %v661, %v705
      %v710 = vadd.f32 %v662, %v706
      %711 = vset.pattern.permute.xlu0 9
      %712 = vperm.xlu0 %711, %v261
      %v713 = vpop.permute.xlu0 %712
      %714 = vset.pattern.permute.xlu0 9
      %715 = vperm.xlu0 %714, %v262
      %v716 = vpop.permute.xlu0 %715
      %717 = vset.pattern.permute.xlu0 9
      %718 = vperm.xlu0 %717, %v263
      %v719 = vpop.permute.xlu0 %718
      %720 = vset.pattern.permute.xlu0 9
      %721 = vperm.xlu0 %720, %v264
      %v722 = vpop.permute.xlu0 %721
      %vm723 = vcmp.eq.s32.totalorder %v713, %v274
      %vm724 = vcmp.eq.s32.totalorder %v716, %v274
      %vm725 = vcmp.eq.s32.totalorder %v719, %v274
      %vm726 = vcmp.eq.s32.totalorder %v722, %v274
      %v727 = vsel %vm723, 1, 0
      %v728 = vsel %vm724, 1, 0
      %v729 = vsel %vm725, 1, 0
      %v730 = vsel %vm726, 1, 0
      %v731 = vcvt.s32.f32 %v727
      %v732 = vcvt.s32.f32 %v728
      %v733 = vcvt.s32.f32 %v729
      %v734 = vcvt.s32.f32 %v730
      %735 = vset.pattern.permute.xlu0 9
      %736 = vperm.xlu0 %735, %v265
      %v737 = vpop.permute.xlu0 %736
      %739 = vset.pattern.permute.xlu0 9
      %740 = vperm.xlu0 %739, %v266
      %v741 = vpop.permute.xlu0 %740
      %743 = vset.pattern.permute.xlu0 9
      %744 = vperm.xlu0 %743, %v267
      %v745 = vpop.permute.xlu0 %744
      %747 = vset.pattern.permute.xlu0 9
      %748 = vperm.xlu0 %747, %v268
      %v749 = vpop.permute.xlu0 %748
      %v751 = vmul.f32 %v737, %v731
      %v752 = vmul.f32 %v741, %v732
      %v753 = vmul.f32 %v745, %v733
      %v754 = vmul.f32 %v749, %v734
      %v755 = vadd.f32 %v707, %v751
      %v756 = vadd.f32 %v708, %v752
      %v757 = vadd.f32 %v709, %v753
      %v758 = vadd.f32 %v710, %v754
      %759 = vset.pattern.permute.xlu0 10
      %760 = vperm.xlu0 %759, %v261
      %v761 = vpop.permute.xlu0 %760
      %762 = vset.pattern.permute.xlu0 10
      %763 = vperm.xlu0 %762, %v262
      %v764 = vpop.permute.xlu0 %763
      %765 = vset.pattern.permute.xlu0 10
      %766 = vperm.xlu0 %765, %v263
      %v767 = vpop.permute.xlu0 %766
      %768 = vset.pattern.permute.xlu0 10
      %769 = vperm.xlu0 %768, %v264
      %v770 = vpop.permute.xlu0 %769
      %vm771 = vcmp.eq.s32.totalorder %v761, %v274
      %vm772 = vcmp.eq.s32.totalorder %v764, %v274
      %vm773 = vcmp.eq.s32.totalorder %v767, %v274
      %vm774 = vcmp.eq.s32.totalorder %v770, %v274
      %v775 = vsel %vm771, 1, 0
      %v776 = vsel %vm772, 1, 0
      %v777 = vsel %vm773, 1, 0
      %v778 = vsel %vm774, 1, 0
      %v779 = vcvt.s32.f32 %v775
      %v780 = vcvt.s32.f32 %v776
      %v781 = vcvt.s32.f32 %v777
      %v782 = vcvt.s32.f32 %v778
      %783 = vset.pattern.permute.xlu0 10
      %784 = vperm.xlu0 %783, %v265
      %v785 = vpop.permute.xlu0 %784
      %787 = vset.pattern.permute.xlu0 10
      %788 = vperm.xlu0 %787, %v266
      %v789 = vpop.permute.xlu0 %788
      %791 = vset.pattern.permute.xlu0 10
      %792 = vperm.xlu0 %791, %v267
      %v793 = vpop.permute.xlu0 %792
      %795 = vset.pattern.permute.xlu0 10
      %796 = vperm.xlu0 %795, %v268
      %v797 = vpop.permute.xlu0 %796
      %v799 = vmul.f32 %v785, %v779
      %v800 = vmul.f32 %v789, %v780
      %v801 = vmul.f32 %v793, %v781
      %v802 = vmul.f32 %v797, %v782
      %v803 = vadd.f32 %v755, %v799
      %v804 = vadd.f32 %v756, %v800
      %v805 = vadd.f32 %v757, %v801
      %v806 = vadd.f32 %v758, %v802
      %807 = vset.pattern.permute.xlu0 11
      %808 = vperm.xlu0 %807, %v261
      %v809 = vpop.permute.xlu0 %808
      %810 = vset.pattern.permute.xlu0 11
      %811 = vperm.xlu0 %810, %v262
      %v812 = vpop.permute.xlu0 %811
      %813 = vset.pattern.permute.xlu0 11
      %814 = vperm.xlu0 %813, %v263
      %v815 = vpop.permute.xlu0 %814
      %816 = vset.pattern.permute.xlu0 11
      %817 = vperm.xlu0 %816, %v264
      %v818 = vpop.permute.xlu0 %817
      %vm819 = vcmp.eq.s32.totalorder %v809, %v274
      %vm820 = vcmp.eq.s32.totalorder %v812, %v274
      %vm821 = vcmp.eq.s32.totalorder %v815, %v274
      %vm822 = vcmp.eq.s32.totalorder %v818, %v274
      %v823 = vsel %vm819, 1, 0
      %v824 = vsel %vm820, 1, 0
      %v825 = vsel %vm821, 1, 0
      %v826 = vsel %vm822, 1, 0
      %v827 = vcvt.s32.f32 %v823
      %v828 = vcvt.s32.f32 %v824
      %v829 = vcvt.s32.f32 %v825
      %v830 = vcvt.s32.f32 %v826
      %831 = vset.pattern.permute.xlu0 11
      %832 = vperm.xlu0 %831, %v265
      %v833 = vpop.permute.xlu0 %832
      %835 = vset.pattern.permute.xlu0 11
      %836 = vperm.xlu0 %835, %v266
      %v837 = vpop.permute.xlu0 %836
      %839 = vset.pattern.permute.xlu0 11
      %840 = vperm.xlu0 %839, %v267
      %v841 = vpop.permute.xlu0 %840
      %843 = vset.pattern.permute.xlu0 11
      %844 = vperm.xlu0 %843, %v268
      %v845 = vpop.permute.xlu0 %844
      %v847 = vmul.f32 %v833, %v827
      %v848 = vmul.f32 %v837, %v828
      %v849 = vmul.f32 %v841, %v829
      %v850 = vmul.f32 %v845, %v830
      %v851 = vadd.f32 %v803, %v847
      %v852 = vadd.f32 %v804, %v848
      %v853 = vadd.f32 %v805, %v849
      %v854 = vadd.f32 %v806, %v850
      %855 = vset.pattern.permute.xlu0 12
      %856 = vperm.xlu0 %855, %v261
      %v857 = vpop.permute.xlu0 %856
      %858 = vset.pattern.permute.xlu0 12
      %859 = vperm.xlu0 %858, %v262
      %v860 = vpop.permute.xlu0 %859
      %861 = vset.pattern.permute.xlu0 12
      %862 = vperm.xlu0 %861, %v263
      %v863 = vpop.permute.xlu0 %862
      %864 = vset.pattern.permute.xlu0 12
      %865 = vperm.xlu0 %864, %v264
      %v866 = vpop.permute.xlu0 %865
      %vm867 = vcmp.eq.s32.totalorder %v857, %v274
      %vm868 = vcmp.eq.s32.totalorder %v860, %v274
      %vm869 = vcmp.eq.s32.totalorder %v863, %v274
      %vm870 = vcmp.eq.s32.totalorder %v866, %v274
      %v871 = vsel %vm867, 1, 0
      %v872 = vsel %vm868, 1, 0
      %v873 = vsel %vm869, 1, 0
      %v874 = vsel %vm870, 1, 0
      %v875 = vcvt.s32.f32 %v871
      %v876 = vcvt.s32.f32 %v872
      %v877 = vcvt.s32.f32 %v873
      %v878 = vcvt.s32.f32 %v874
      %879 = vset.pattern.permute.xlu0 12
      %880 = vperm.xlu0 %879, %v265
      %v881 = vpop.permute.xlu0 %880
      %883 = vset.pattern.permute.xlu0 12
      %884 = vperm.xlu0 %883, %v266
      %v885 = vpop.permute.xlu0 %884
      %887 = vset.pattern.permute.xlu0 12
      %888 = vperm.xlu0 %887, %v267
      %v889 = vpop.permute.xlu0 %888
      %891 = vset.pattern.permute.xlu0 12
      %892 = vperm.xlu0 %891, %v268
      %v893 = vpop.permute.xlu0 %892
      %v895 = vmul.f32 %v881, %v875
      %v896 = vmul.f32 %v885, %v876
      %v897 = vmul.f32 %v889, %v877
      %v898 = vmul.f32 %v893, %v878
      %v899 = vadd.f32 %v851, %v895
      %v900 = vadd.f32 %v852, %v896
      %v901 = vadd.f32 %v853, %v897
      %v902 = vadd.f32 %v854, %v898
      %903 = vset.pattern.permute.xlu0 13
      %904 = vperm.xlu0 %903, %v261
      %v905 = vpop.permute.xlu0 %904
      %906 = vset.pattern.permute.xlu0 13
      %907 = vperm.xlu0 %906, %v262
      %v908 = vpop.permute.xlu0 %907
      %909 = vset.pattern.permute.xlu0 13
      %910 = vperm.xlu0 %909, %v263
      %v911 = vpop.permute.xlu0 %910
      %912 = vset.pattern.permute.xlu0 13
      %913 = vperm.xlu0 %912, %v264
      %v914 = vpop.permute.xlu0 %913
      %vm915 = vcmp.eq.s32.totalorder %v905, %v274
      %vm916 = vcmp.eq.s32.totalorder %v908, %v274
      %vm917 = vcmp.eq.s32.totalorder %v911, %v274
      %vm918 = vcmp.eq.s32.totalorder %v914, %v274
      %v919 = vsel %vm915, 1, 0
      %v920 = vsel %vm916, 1, 0
      %v921 = vsel %vm917, 1, 0
      %v922 = vsel %vm918, 1, 0
      %v923 = vcvt.s32.f32 %v919
      %v924 = vcvt.s32.f32 %v920
      %v925 = vcvt.s32.f32 %v921
      %v926 = vcvt.s32.f32 %v922
      %927 = vset.pattern.permute.xlu0 13
      %928 = vperm.xlu0 %927, %v265
      %v929 = vpop.permute.xlu0 %928
      %931 = vset.pattern.permute.xlu0 13
      %932 = vperm.xlu0 %931, %v266
      %v933 = vpop.permute.xlu0 %932
      %935 = vset.pattern.permute.xlu0 13
      %936 = vperm.xlu0 %935, %v267
      %v937 = vpop.permute.xlu0 %936
      %939 = vset.pattern.permute.xlu0 13
      %940 = vperm.xlu0 %939, %v268
      %v941 = vpop.permute.xlu0 %940
      %v943 = vmul.f32 %v929, %v923
      %v944 = vmul.f32 %v933, %v924
      %v945 = vmul.f32 %v937, %v925
      %v946 = vmul.f32 %v941, %v926
      %v947 = vadd.f32 %v899, %v943
      %v948 = vadd.f32 %v900, %v944
      %v949 = vadd.f32 %v901, %v945
      %v950 = vadd.f32 %v902, %v946
      %951 = vset.pattern.permute.xlu0 14
      %952 = vperm.xlu0 %951, %v261
      %v953 = vpop.permute.xlu0 %952
      %954 = vset.pattern.permute.xlu0 14
      %955 = vperm.xlu0 %954, %v262
      %v956 = vpop.permute.xlu0 %955
      %957 = vset.pattern.permute.xlu0 14
      %958 = vperm.xlu0 %957, %v263
      %v959 = vpop.permute.xlu0 %958
      %960 = vset.pattern.permute.xlu0 14
      %961 = vperm.xlu0 %960, %v264
      %v962 = vpop.permute.xlu0 %961
      %vm963 = vcmp.eq.s32.totalorder %v953, %v274
      %vm964 = vcmp.eq.s32.totalorder %v956, %v274
      %vm965 = vcmp.eq.s32.totalorder %v959, %v274
      %vm966 = vcmp.eq.s32.totalorder %v962, %v274
      %v967 = vsel %vm963, 1, 0
      %v968 = vsel %vm964, 1, 0
      %v969 = vsel %vm965, 1, 0
      %v970 = vsel %vm966, 1, 0
      %v971 = vcvt.s32.f32 %v967
      %v972 = vcvt.s32.f32 %v968
      %v973 = vcvt.s32.f32 %v969
      %v974 = vcvt.s32.f32 %v970
      %975 = vset.pattern.permute.xlu0 14
      %976 = vperm.xlu0 %975, %v265
      %v977 = vpop.permute.xlu0 %976
      %979 = vset.pattern.permute.xlu0 14
      %980 = vperm.xlu0 %979, %v266
      %v981 = vpop.permute.xlu0 %980
      %983 = vset.pattern.permute.xlu0 14
      %984 = vperm.xlu0 %983, %v267
      %v985 = vpop.permute.xlu0 %984
      %987 = vset.pattern.permute.xlu0 14
      %988 = vperm.xlu0 %987, %v268
      %v989 = vpop.permute.xlu0 %988
      %v991 = vmul.f32 %v977, %v971
      %v992 = vmul.f32 %v981, %v972
      %v993 = vmul.f32 %v985, %v973
      %v994 = vmul.f32 %v989, %v974
      %v995 = vadd.f32 %v947, %v991
      %v996 = vadd.f32 %v948, %v992
      %v997 = vadd.f32 %v949, %v993
      %v998 = vadd.f32 %v950, %v994
      %999 = vset.pattern.permute.xlu0 15
      %1000 = vperm.xlu0 %999, %v261
      %v1001 = vpop.permute.xlu0 %1000
      %1002 = vset.pattern.permute.xlu0 15
      %1003 = vperm.xlu0 %1002, %v262
      %v1004 = vpop.permute.xlu0 %1003
      %1005 = vset.pattern.permute.xlu0 15
      %1006 = vperm.xlu0 %1005, %v263
      %v1007 = vpop.permute.xlu0 %1006
      %1008 = vset.pattern.permute.xlu0 15
      %1009 = vperm.xlu0 %1008, %v264
      %v1010 = vpop.permute.xlu0 %1009
      %vm1011 = vcmp.eq.s32.totalorder %v1001, %v274
      %vm1012 = vcmp.eq.s32.totalorder %v1004, %v274
      %vm1013 = vcmp.eq.s32.totalorder %v1007, %v274
      %vm1014 = vcmp.eq.s32.totalorder %v1010, %v274
      %v1015 = vsel %vm1011, 1, 0
      %v1016 = vsel %vm1012, 1, 0
      %v1017 = vsel %vm1013, 1, 0
      %v1018 = vsel %vm1014, 1, 0
      %v1019 = vcvt.s32.f32 %v1015
      %v1020 = vcvt.s32.f32 %v1016
      %v1021 = vcvt.s32.f32 %v1017
      %v1022 = vcvt.s32.f32 %v1018
      %1023 = vset.pattern.permute.xlu0 15
      %1024 = vperm.xlu0 %1023, %v265
      %v1025 = vpop.permute.xlu0 %1024
      %1027 = vset.pattern.permute.xlu0 15
      %1028 = vperm.xlu0 %1027, %v266
      %v1029 = vpop.permute.xlu0 %1028
      %1031 = vset.pattern.permute.xlu0 15
      %1032 = vperm.xlu0 %1031, %v267
      %v1033 = vpop.permute.xlu0 %1032
      %1035 = vset.pattern.permute.xlu0 15
      %1036 = vperm.xlu0 %1035, %v268
      %v1037 = vpop.permute.xlu0 %1036
      %v1039 = vmul.f32 %v1025, %v1019
      %v1040 = vmul.f32 %v1029, %v1020
      %v1041 = vmul.f32 %v1033, %v1021
      %v1042 = vmul.f32 %v1037, %v1022
      %v1043 = vadd.f32 %v995, %v1039
      %v1044 = vadd.f32 %v996, %v1040
      %v1045 = vadd.f32 %v997, %v1041
      %v1046 = vadd.f32 %v998, %v1042
      %1047 = vmatprep.subr.mxu0 0.0
      %1048 = vmatpush1.msra.mxu0 %v260
      %1049 = vmatprep.subr.mxu0 0.0
      %1050 = vmatpush1.msra.mxu0 %v259
      %1051 = vmatprep.subr.mxu0 0.0
      %1052 = vmatpush1.msra.mxu0 %v258
      %1053 = vmatprep.subr.mxu0 0.0
      %1054 = vmatpush1.msra.mxu0 %v257
      %1055 = vmatprep.subr.mxu0 0.0
      %1056 = vmatpush1.msra.mxu0 %v256
      %1057 = vmatprep.subr.mxu0 0.0
      %1058 = vmatpush1.msra.mxu0 %v255
      %1059 = vmatprep.subr.mxu0 0.0
      %1060 = vmatpush1.msra.mxu0 %v254
      %1061 = vmatprep.subr.mxu0 0.0
      %1062 = vmatpush1.msra.mxu0 %v253
      %1063 = vmatprep.subr.mxu0 0.0
      %1064 = vmatpush1.msra.mxu0 %v252
      %1065 = vmatprep.subr.mxu0 0.0
      %1066 = vmatpush1.msra.mxu0 %v251
      %1067 = vmatprep.subr.mxu0 0.0
      %1068 = vmatpush1.msra.mxu0 %v250
      %1069 = vmatprep.subr.mxu0 0.0
      %1070 = vmatpush1.msra.mxu0 %v249
      %1071 = vmatprep.subr.mxu0 0.0
      %1072 = vmatpush1.msra.mxu0 %v248
      %1073 = vmatprep.subr.mxu0 0.0
      %1074 = vmatpush1.msra.mxu0 %v247
      %1075 = vmatprep.subr.mxu0 0.0
      %1076 = vmatpush1.msra.mxu0 %v246
      %1077 = vmatprep.subr.mxu0 0.0
      %1078 = vmatpush1.msra.mxu0 %v245
      %1079 = vmatprep.subr.mxu0 0.0
      %1080 = vmatpush2.msra.mxu0 0.0
      %1081 = vmatprep.subr.mxu0 0.0
      %1082 = vmatpush2.msra.mxu0 0.0
      %1083 = vmatprep.subr.mxu0 0.0
      %1084 = vmatpush2.msra.mxu0 0.0
      %1085 = vmatprep.subr.mxu0 0.0
      %1086 = vmatpush2.msra.mxu0 0.0
      %1087 = vmatprep.subr.mxu0 0.0
      %1088 = vmatpush2.msra.mxu0 0.0
      %1089 = vmatprep.subr.mxu0 0.0
      %1090 = vmatpush2.msra.mxu0 0.0
      %1091 = vmatprep.subr.mxu0 0.0
      %1092 = vmatpush2.msra.mxu0 0.0
      %1093 = vmatprep.subr.mxu0 0.0
      %1094 = vmatpush2.msra.mxu0 0.0
      %1095 = vmatprep.subr.mxu0 0.0
      %1096 = vmatpush2.msra.mxu0 0.0
      %1097 = vmatprep.subr.mxu0 0.0
      %1098 = vmatpush2.msra.mxu0 0.0
      %1099 = vmatprep.subr.mxu0 0.0
      %1100 = vmatpush2.msra.mxu0 0.0
      %1101 = vmatprep.subr.mxu0 0.0
      %1102 = vmatpush2.msra.mxu0 0.0
      %1103 = vmatprep.subr.mxu0 0.0
      %1104 = vmatpush2.msra.mxu0 0.0
      %1105 = vmatprep.subr.mxu0 0.0
      %1106 = vmatpush2.msra.mxu0 0.0
      %1107 = vmatprep.subr.mxu0 0.0
      %1108 = vmatpush2.msra.mxu0 0.0
      %1109 = vmatprep.subr.mxu0 0.0
      %1110 = vmatpush2.msra.mxu0 0.0
      %1111 = vmatprep.mubr.f32.mxu0 0.0
      %1112 = vmatmul.mubr.f32.gmra.mxu0 %v1043
      %v1113 = vpop.f32.mrf.mxu0
      %v1114 = vadd.f32 0.0, %v1113
      %v1115 = vpop.f32.mrf.mxu0
      %1116 = vmatprep.mubr.f32.mxu0 0.0
      %1117 = vmatmul.mubr.f32.gmra.mxu0 %v1044
      %v1118 = vpop.f32.mrf.mxu0
      %v1119 = vadd.f32 0.0, %v1118
      %v1120 = vpop.f32.mrf.mxu0
      %1121 = vmatprep.mubr.f32.mxu0 0.0
      %1122 = vmatmul.mubr.f32.gmra.mxu0 %v1045
      %v1123 = vpop.f32.mrf.mxu0
      %v1124 = vadd.f32 0.0, %v1123
      %v1125 = vpop.f32.mrf.mxu0
      %1126 = vmatprep.mubr.f32.mxu0 0.0
      %1127 = vmatmul.mubr.f32.gmra.mxu0 %v1046
      %v1128 = vpop.f32.mrf.mxu0
      %v1129 = vadd.f32 0.0, %v1128
      %v1130 = vpop.f32.mrf.mxu0
      %1131 = vdwg.mxu0
      %1132 = vmatprep.subr.mxu0 0.0
      %1133 = vmatpush1.xpose.msra.mxu0 %v260
      %1134 = vmatprep.subr.mxu0 0.0
      %1135 = vmatpush1.xpose.msra.mxu0 %v259
      %1136 = vmatprep.subr.mxu0 0.0
      %1137 = vmatpush1.xpose.msra.mxu0 %v258
      %1138 = vmatprep.subr.mxu0 0.0
      %1139 = vmatpush1.xpose.msra.mxu0 %v257
      %1140 = vmatprep.subr.mxu0 0.0
      %1141 = vmatpush1.xpose.msra.mxu0 %v256
      %1142 = vmatprep.subr.mxu0 0.0
      %1143 = vmatpush1.xpose.msra.mxu0 %v255
      %1144 = vmatprep.subr.mxu0 0.0
      %1145 = vmatpush1.xpose.msra.mxu0 %v254
      %1146 = vmatprep.subr.mxu0 0.0
      %1147 = vmatpush1.xpose.msra.mxu0 %v253
      %1148 = vmatprep.subr.mxu0 0.0
      %1149 = vmatpush1.xpose.msra.mxu0 %v252
      %1150 = vmatprep.subr.mxu0 0.0
      %1151 = vmatpush1.xpose.msra.mxu0 %v251
      %1152 = vmatprep.subr.mxu0 0.0
      %1153 = vmatpush1.xpose.msra.mxu0 %v250
      %1154 = vmatprep.subr.mxu0 0.0
      %1155 = vmatpush1.xpose.msra.mxu0 %v249
      %1156 = vmatprep.subr.mxu0 0.0
      %1157 = vmatpush1.xpose.msra.mxu0 %v248
      %1158 = vmatprep.subr.mxu0 0.0
      %1159 = vmatpush1.xpose.msra.mxu0 %v247
      %1160 = vmatprep.subr.mxu0 0.0
      %1161 = vmatpush1.xpose.msra.mxu0 %v246
      %1162 = vmatprep.subr.mxu0 0.0
      %1163 = vmatpush1.xpose.msra.mxu0 %v245
      %1164 = vmatprep.subr.mxu0 0.0
      %1165 = vmatpush2.xpose.msra.mxu0 0.0
      %1166 = vmatprep.subr.mxu0 0.0
      %1167 = vmatpush2.xpose.msra.mxu0 0.0
      %1168 = vmatprep.subr.mxu0 0.0
      %1169 = vmatpush2.xpose.msra.mxu0 0.0
      %1170 = vmatprep.subr.mxu0 0.0
      %1171 = vmatpush2.xpose.msra.mxu0 0.0
      %1172 = vmatprep.subr.mxu0 0.0
      %1173 = vmatpush2.xpose.msra.mxu0 0.0
      %1174 = vmatprep.subr.mxu0 0.0
      %1175 = vmatpush2.xpose.msra.mxu0 0.0
      %1176 = vmatprep.subr.mxu0 0.0
      %1177 = vmatpush2.xpose.msra.mxu0 0.0
      %1178 = vmatprep.subr.mxu0 0.0
      %1179 = vmatpush2.xpose.msra.mxu0 0.0
      %1180 = vmatprep.subr.mxu0 0.0
      %1181 = vmatpush2.xpose.msra.mxu0 0.0
      %1182 = vmatprep.subr.mxu0 0.0
      %1183 = vmatpush2.xpose.msra.mxu0 0.0
      %1184 = vmatprep.subr.mxu0 0.0
      %1185 = vmatpush2.xpose.msra.mxu0 0.0
      %1186 = vmatprep.subr.mxu0 0.0
      %1187 = vmatpush2.xpose.msra.mxu0 0.0
      %1188 = vmatprep.subr.mxu0 0.0
      %1189 = vmatpush2.xpose.msra.mxu0 0.0
      %1190 = vmatprep.subr.mxu0 0.0
      %1191 = vmatpush2.xpose.msra.mxu0 0.0
      %1192 = vmatprep.subr.mxu0 0.0
      %1193 = vmatpush2.xpose.msra.mxu0 0.0
      %1194 = vmatprep.subr.mxu0 0.0
      %1195 = vmatpush2.xpose.msra.mxu0 0.0
      %1196 = vmatprep.mubr.f32.mxu0 0.0
      %1197 = vmatmul.mubr.f32.gmra.mxu0 %v1114
      %v1198 = vpop.f32.mrf.mxu0
      %v1199 = vadd.f32 0.0, %v1198
      %v1200 = vpop.f32.mrf.mxu0
      %1201 = vmatprep.mubr.f32.mxu0 0.0
      %1202 = vmatmul.mubr.f32.gmra.mxu0 %v1119
      %v1203 = vpop.f32.mrf.mxu0
      %v1204 = vadd.f32 0.0, %v1203
      %v1205 = vpop.f32.mrf.mxu0
      %1206 = vmatprep.mubr.f32.mxu0 0.0
      %1207 = vmatmul.mubr.f32.gmra.mxu0 %v1124
      %v1208 = vpop.f32.mrf.mxu0
      %v1209 = vadd.f32 0.0, %v1208
      %v1210 = vpop.f32.mrf.mxu0
      %1211 = vmatprep.mubr.f32.mxu0 0.0
      %1212 = vmatmul.mubr.f32.gmra.mxu0 %v1129
      %v1213 = vpop.f32.mrf.mxu0
      %v1214 = vadd.f32 0.0, %v1213
      %v1215 = vpop.f32.mrf.mxu0
      %1216 = vdwg.mxu0
      %1217 = vset.pattern.permute.xlu0 0
      %1218 = vperm.xlu0 %1217, %v269
      %v1219 = vpop.permute.xlu0 %1218
      %1220 = vset.pattern.permute.xlu0 0
      %1221 = vperm.xlu0 %1220, %v270
      %v1222 = vpop.permute.xlu0 %1221
      %1223 = vset.pattern.permute.xlu0 0
      %1224 = vperm.xlu0 %1223, %v271
      %v1225 = vpop.permute.xlu0 %1224
      %1226 = vset.pattern.permute.xlu0 0
      %1227 = vperm.xlu0 %1226, %v272
      %v1228 = vpop.permute.xlu0 %1227
      %vm1229 = vcmp.eq.s32.totalorder %v1219, %v274
      %vm1230 = vcmp.eq.s32.totalorder %v1222, %v274
      %vm1231 = vcmp.eq.s32.totalorder %v1225, %v274
      %vm1232 = vcmp.eq.s32.totalorder %v1228, %v274
      %v1233 = vsel %vm1229, 1, 0
      %v1234 = vsel %vm1230, 1, 0
      %v1235 = vsel %vm1231, 1, 0
      %v1236 = vsel %vm1232, 1, 0
      %v1237 = vcvt.s32.f32 %v1233
      %v1238 = vcvt.s32.f32 %v1234
      %v1239 = vcvt.s32.f32 %v1235
      %v1240 = vcvt.s32.f32 %v1236
      %v1241 = vmul.f32 %v1237, %v1199
      %v1242 = vmul.f32 %v1238, %v1204
      %v1243 = vmul.f32 %v1239, %v1209
      %v1244 = vmul.f32 %v1240, %v1214
      %1245 = vadd.xlane.f32.xlu0 %v1241
      %v1246 = vpop.xlane.xlu0 %1245
      %1247 = vadd.xlane.f32.xlu0 %v1242
      %v1248 = vpop.xlane.xlu0 %1247
      %1249 = vadd.xlane.f32.xlu0 %v1243
      %v1250 = vpop.xlane.xlu0 %1249
      %1251 = vadd.xlane.f32.xlu0 %v1244
      %v1252 = vpop.xlane.xlu0 %1251
      %vm1253 = vcmp.eq.s32.totalorder %v274, 0
      %v1254 = vsel %vm1253, 1, 0
      %v1255 = vcvt.s32.f32 %v1254
      %v1256 = vmul.f32 %v1255, %v1246
      %v1257 = vmul.f32 %v1255, %v1248
      %v1258 = vmul.f32 %v1255, %v1250
      %v1259 = vmul.f32 %v1255, %v1252
      %v1260 = vadd.f32 %v1256, 0.0
      %v1261 = vadd.f32 %v1257, 0.0
      %v1262 = vadd.f32 %v1258, 0.0
      %v1263 = vadd.f32 %v1259, 0.0
      %1264 = vset.pattern.permute.xlu0 1
      %1265 = vperm.xlu0 %1264, %v269
      %v1266 = vpop.permute.xlu0 %1265
      %1267 = vset.pattern.permute.xlu0 1
      %1268 = vperm.xlu0 %1267, %v270
      %v1269 = vpop.permute.xlu0 %1268
      %1270 = vset.pattern.permute.xlu0 1
      %1271 = vperm.xlu0 %1270, %v271
      %v1272 = vpop.permute.xlu0 %1271
      %1273 = vset.pattern.permute.xlu0 1
      %1274 = vperm.xlu0 %1273, %v272
      %v1275 = vpop.permute.xlu0 %1274
      %vm1276 = vcmp.eq.s32.totalorder %v1266, %v274
      %vm1277 = vcmp.eq.s32.totalorder %v1269, %v274
      %vm1278 = vcmp.eq.s32.totalorder %v1272, %v274
      %vm1279 = vcmp.eq.s32.totalorder %v1275, %v274
      %v1280 = vsel %vm1276, 1, 0
      %v1281 = vsel %vm1277, 1, 0
      %v1282 = vsel %vm1278, 1, 0
      %v1283 = vsel %vm1279, 1, 0
      %v1284 = vcvt.s32.f32 %v1280
      %v1285 = vcvt.s32.f32 %v1281
      %v1286 = vcvt.s32.f32 %v1282
      %v1287 = vcvt.s32.f32 %v1283
      %v1288 = vmul.f32 %v1284, %v1199
      %v1289 = vmul.f32 %v1285, %v1204
      %v1290 = vmul.f32 %v1286, %v1209
      %v1291 = vmul.f32 %v1287, %v1214
      %1292 = vadd.xlane.f32.xlu0 %v1288
      %v1293 = vpop.xlane.xlu0 %1292
      %1294 = vadd.xlane.f32.xlu0 %v1289
      %v1295 = vpop.xlane.xlu0 %1294
      %1296 = vadd.xlane.f32.xlu0 %v1290
      %v1297 = vpop.xlane.xlu0 %1296
      %1298 = vadd.xlane.f32.xlu0 %v1291
      %v1299 = vpop.xlane.xlu0 %1298
      %vm1300 = vcmp.eq.s32.totalorder %v274, 1
      %v1301 = vsel %vm1300, 1, 0
      %v1302 = vcvt.s32.f32 %v1301
      %v1303 = vmul.f32 %v1302, %v1293
      %v1304 = vmul.f32 %v1302, %v1295
      %v1305 = vmul.f32 %v1302, %v1297
      %v1306 = vmul.f32 %v1302, %v1299
      %v1307 = vadd.f32 %v1260, %v1303
      %v1308 = vadd.f32 %v1261, %v1304
      %v1309 = vadd.f32 %v1262, %v1305
      %v1310 = vadd.f32 %v1263, %v1306
      %1311 = vset.pattern.permute.xlu0 2
      %1312 = vperm.xlu0 %1311, %v269
      %v1313 = vpop.permute.xlu0 %1312
      %1314 = vset.pattern.permute.xlu0 2
      %1315 = vperm.xlu0 %1314, %v270
      %v1316 = vpop.permute.xlu0 %1315
      %1317 = vset.pattern.permute.xlu0 2
      %1318 = vperm.xlu0 %1317, %v271
      %v1319 = vpop.permute.xlu0 %1318
      %1320 = vset.pattern.permute.xlu0 2
      %1321 = vperm.xlu0 %1320, %v272
      %v1322 = vpop.permute.xlu0 %1321
      %vm1323 = vcmp.eq.s32.totalorder %v1313, %v274
      %vm1324 = vcmp.eq.s32.totalorder %v1316, %v274
      %vm1325 = vcmp.eq.s32.totalorder %v1319, %v274
      %vm1326 = vcmp.eq.s32.totalorder %v1322, %v274
      %v1327 = vsel %vm1323, 1, 0
      %v1328 = vsel %vm1324, 1, 0
      %v1329 = vsel %vm1325, 1, 0
      %v1330 = vsel %vm1326, 1, 0
      %v1331 = vcvt.s32.f32 %v1327
      %v1332 = vcvt.s32.f32 %v1328
      %v1333 = vcvt.s32.f32 %v1329
      %v1334 = vcvt.s32.f32 %v1330
      %v1335 = vmul.f32 %v1331, %v1199
      %v1336 = vmul.f32 %v1332, %v1204
      %v1337 = vmul.f32 %v1333, %v1209
      %v1338 = vmul.f32 %v1334, %v1214
      %1339 = vadd.xlane.f32.xlu0 %v1335
      %v1340 = vpop.xlane.xlu0 %1339
      %1341 = vadd.xlane.f32.xlu0 %v1336
      %v1342 = vpop.xlane.xlu0 %1341
      %1343 = vadd.xlane.f32.xlu0 %v1337
      %v1344 = vpop.xlane.xlu0 %1343
      %1345 = vadd.xlane.f32.xlu0 %v1338
      %v1346 = vpop.xlane.xlu0 %1345
      %vm1347 = vcmp.eq.s32.totalorder %v274, 2
      %v1348 = vsel %vm1347, 1, 0
      %v1349 = vcvt.s32.f32 %v1348
      %v1350 = vmul.f32 %v1349, %v1340
      %v1351 = vmul.f32 %v1349, %v1342
      %v1352 = vmul.f32 %v1349, %v1344
      %v1353 = vmul.f32 %v1349, %v1346
      %v1354 = vadd.f32 %v1307, %v1350
      %v1355 = vadd.f32 %v1308, %v1351
      %v1356 = vadd.f32 %v1309, %v1352
      %v1357 = vadd.f32 %v1310, %v1353
      %1358 = vset.pattern.permute.xlu0 3
      %1359 = vperm.xlu0 %1358, %v269
      %v1360 = vpop.permute.xlu0 %1359
      %1361 = vset.pattern.permute.xlu0 3
      %1362 = vperm.xlu0 %1361, %v270
      %v1363 = vpop.permute.xlu0 %1362
      %1364 = vset.pattern.permute.xlu0 3
      %1365 = vperm.xlu0 %1364, %v271
      %v1366 = vpop.permute.xlu0 %1365
      %1367 = vset.pattern.permute.xlu0 3
      %1368 = vperm.xlu0 %1367, %v272
      %v1369 = vpop.permute.xlu0 %1368
      %vm1370 = vcmp.eq.s32.totalorder %v1360, %v274
      %vm1371 = vcmp.eq.s32.totalorder %v1363, %v274
      %vm1372 = vcmp.eq.s32.totalorder %v1366, %v274
      %vm1373 = vcmp.eq.s32.totalorder %v1369, %v274
      %v1374 = vsel %vm1370, 1, 0
      %v1375 = vsel %vm1371, 1, 0
      %v1376 = vsel %vm1372, 1, 0
      %v1377 = vsel %vm1373, 1, 0
      %v1378 = vcvt.s32.f32 %v1374
      %v1379 = vcvt.s32.f32 %v1375
      %v1380 = vcvt.s32.f32 %v1376
      %v1381 = vcvt.s32.f32 %v1377
      %v1382 = vmul.f32 %v1378, %v1199
      %v1383 = vmul.f32 %v1379, %v1204
      %v1384 = vmul.f32 %v1380, %v1209
      %v1385 = vmul.f32 %v1381, %v1214
      %1386 = vadd.xlane.f32.xlu0 %v1382
      %v1387 = vpop.xlane.xlu0 %1386
      %1388 = vadd.xlane.f32.xlu0 %v1383
      %v1389 = vpop.xlane.xlu0 %1388
      %1390 = vadd.xlane.f32.xlu0 %v1384
      %v1391 = vpop.xlane.xlu0 %1390
      %1392 = vadd.xlane.f32.xlu0 %v1385
      %v1393 = vpop.xlane.xlu0 %1392
      %vm1394 = vcmp.eq.s32.totalorder %v274, 3
      %v1395 = vsel %vm1394, 1, 0
      %v1396 = vcvt.s32.f32 %v1395
      %v1397 = vmul.f32 %v1396, %v1387
      %v1398 = vmul.f32 %v1396, %v1389
      %v1399 = vmul.f32 %v1396, %v1391
      %v1400 = vmul.f32 %v1396, %v1393
      %v1401 = vadd.f32 %v1354, %v1397
      %v1402 = vadd.f32 %v1355, %v1398
      %v1403 = vadd.f32 %v1356, %v1399
      %v1404 = vadd.f32 %v1357, %v1400
      %1405 = vset.pattern.permute.xlu0 4
      %1406 = vperm.xlu0 %1405, %v269
      %v1407 = vpop.permute.xlu0 %1406
      %1408 = vset.pattern.permute.xlu0 4
      %1409 = vperm.xlu0 %1408, %v270
      %v1410 = vpop.permute.xlu0 %1409
      %1411 = vset.pattern.permute.xlu0 4
      %1412 = vperm.xlu0 %1411, %v271
      %v1413 = vpop.permute.xlu0 %1412
      %1414 = vset.pattern.permute.xlu0 4
      %1415 = vperm.xlu0 %1414, %v272
      %v1416 = vpop.permute.xlu0 %1415
      %vm1417 = vcmp.eq.s32.totalorder %v1407, %v274
      %vm1418 = vcmp.eq.s32.totalorder %v1410, %v274
      %vm1419 = vcmp.eq.s32.totalorder %v1413, %v274
      %vm1420 = vcmp.eq.s32.totalorder %v1416, %v274
      %v1421 = vsel %vm1417, 1, 0
      %v1422 = vsel %vm1418, 1, 0
      %v1423 = vsel %vm1419, 1, 0
      %v1424 = vsel %vm1420, 1, 0
      %v1425 = vcvt.s32.f32 %v1421
      %v1426 = vcvt.s32.f32 %v1422
      %v1427 = vcvt.s32.f32 %v1423
      %v1428 = vcvt.s32.f32 %v1424
      %v1429 = vmul.f32 %v1425, %v1199
      %v1430 = vmul.f32 %v1426, %v1204
      %v1431 = vmul.f32 %v1427, %v1209
      %v1432 = vmul.f32 %v1428, %v1214
      %1433 = vadd.xlane.f32.xlu0 %v1429
      %v1434 = vpop.xlane.xlu0 %1433
      %1435 = vadd.xlane.f32.xlu0 %v1430
      %v1436 = vpop.xlane.xlu0 %1435
      %1437 = vadd.xlane.f32.xlu0 %v1431
      %v1438 = vpop.xlane.xlu0 %1437
      %1439 = vadd.xlane.f32.xlu0 %v1432
      %v1440 = vpop.xlane.xlu0 %1439
      %vm1441 = vcmp.eq.s32.totalorder %v274, 4
      %v1442 = vsel %vm1441, 1, 0
      %v1443 = vcvt.s32.f32 %v1442
      %v1444 = vmul.f32 %v1443, %v1434
      %v1445 = vmul.f32 %v1443, %v1436
      %v1446 = vmul.f32 %v1443, %v1438
      %v1447 = vmul.f32 %v1443, %v1440
      %v1448 = vadd.f32 %v1401, %v1444
      %v1449 = vadd.f32 %v1402, %v1445
      %v1450 = vadd.f32 %v1403, %v1446
      %v1451 = vadd.f32 %v1404, %v1447
      %1452 = vset.pattern.permute.xlu0 5
      %1453 = vperm.xlu0 %1452, %v269
      %v1454 = vpop.permute.xlu0 %1453
      %1455 = vset.pattern.permute.xlu0 5
      %1456 = vperm.xlu0 %1455, %v270
      %v1457 = vpop.permute.xlu0 %1456
      %1458 = vset.pattern.permute.xlu0 5
      %1459 = vperm.xlu0 %1458, %v271
      %v1460 = vpop.permute.xlu0 %1459
      %1461 = vset.pattern.permute.xlu0 5
      %1462 = vperm.xlu0 %1461, %v272
      %v1463 = vpop.permute.xlu0 %1462
      %vm1464 = vcmp.eq.s32.totalorder %v1454, %v274
      %vm1465 = vcmp.eq.s32.totalorder %v1457, %v274
      %vm1466 = vcmp.eq.s32.totalorder %v1460, %v274
      %vm1467 = vcmp.eq.s32.totalorder %v1463, %v274
      %v1468 = vsel %vm1464, 1, 0
      %v1469 = vsel %vm1465, 1, 0
      %v1470 = vsel %vm1466, 1, 0
      %v1471 = vsel %vm1467, 1, 0
      %v1472 = vcvt.s32.f32 %v1468
      %v1473 = vcvt.s32.f32 %v1469
      %v1474 = vcvt.s32.f32 %v1470
      %v1475 = vcvt.s32.f32 %v1471
      %v1476 = vmul.f32 %v1472, %v1199
      %v1477 = vmul.f32 %v1473, %v1204
      %v1478 = vmul.f32 %v1474, %v1209
      %v1479 = vmul.f32 %v1475, %v1214
      %1480 = vadd.xlane.f32.xlu0 %v1476
      %v1481 = vpop.xlane.xlu0 %1480
      %1482 = vadd.xlane.f32.xlu0 %v1477
      %v1483 = vpop.xlane.xlu0 %1482
      %1484 = vadd.xlane.f32.xlu0 %v1478
      %v1485 = vpop.xlane.xlu0 %1484
      %1486 = vadd.xlane.f32.xlu0 %v1479
      %v1487 = vpop.xlane.xlu0 %1486
      %vm1488 = vcmp.eq.s32.totalorder %v274, 5
      %v1489 = vsel %vm1488, 1, 0
      %v1490 = vcvt.s32.f32 %v1489
      %v1491 = vmul.f32 %v1490, %v1481
      %v1492 = vmul.f32 %v1490, %v1483
      %v1493 = vmul.f32 %v1490, %v1485
      %v1494 = vmul.f32 %v1490, %v1487
      %v1495 = vadd.f32 %v1448, %v1491
      %v1496 = vadd.f32 %v1449, %v1492
      %v1497 = vadd.f32 %v1450, %v1493
      %v1498 = vadd.f32 %v1451, %v1494
      %vm1499 = vcmask 48128
      %v1500 = vsel %vm1499, %v1495, -inf
      %1501 = vmax.xlane.f32.xlu0 %v1500
      %v1502 = vpop.xlane.xlu0 %1501
      %v1503 = vsel %vm1499, %v1496, -inf
      %1504 = vmax.xlane.f32.xlu0 %v1503
      %v1505 = vpop.xlane.xlu0 %1504
      %v1506 = vsel %vm1499, %v1497, -inf
      %1507 = vmax.xlane.f32.xlu0 %v1506
      %v1508 = vpop.xlane.xlu0 %1507
      %v1509 = vsel %vm1499, %v1498, -inf
      %1510 = vmax.xlane.f32.xlu0 %v1509
      %v1511 = vpop.xlane.xlu0 %1510
      %v1512 = vsub.f32 %v1495, %v1502
      %v1513 = vsub.f32 %v1496, %v1505
      %v1514 = vsub.f32 %v1497, %v1508
      %v1515 = vsub.f32 %v1498, %v1511
      %v1516 = vmul.f32 %v1512, 1.442695
      %v1517 = vpow.pop %v1516
      %v1518 = vmul.f32 %v1513, 1.442695
      %v1519 = vpow.pop %v1518
      %v1520 = vmul.f32 %v1514, 1.442695
      %v1521 = vpow.pop %v1520
      %v1522 = vmul.f32 %v1515, 1.442695
      %v1523 = vpow.pop %v1522
      %v1524 = vsel %vm1499, %v1517, 0.0
      %1525 = vadd.xlane.f32.xlu0 %v1524
      %v1526 = vpop.xlane.xlu0 %1525
      %v1527 = vsel %vm1499, %v1519, 0.0
      %1528 = vadd.xlane.f32.xlu0 %v1527
      %v1529 = vpop.xlane.xlu0 %1528
      %v1530 = vsel %vm1499, %v1521, 0.0
      %1531 = vadd.xlane.f32.xlu0 %v1530
      %v1532 = vpop.xlane.xlu0 %1531
      %v1533 = vsel %vm1499, %v1523, 0.0
      %1534 = vadd.xlane.f32.xlu0 %v1533
      %v1535 = vpop.xlane.xlu0 %1534
      %v1536 = vrcp.pop %v1526
      %v1537 = vrcp.pop %v1529
      %v1538 = vrcp.pop %v1532
      %v1539 = vrcp.pop %v1535
      %v1540 = vmul.f32 %v1517, %v1536
      %v1541 = vmul.f32 %v1519, %v1537
      %v1542 = vmul.f32 %v1521, %v1538
      %v1543 = vmul.f32 %v1523, %v1539
      %1544 = vst.msk [vmem:[%s243] sm:$0xff] %vm1499, %v1540
      %1545 = vst.msk [vmem:[%s243 + $0x8] sm:$0xff] %vm1499, %v1541
      %1546 = vst.msk [vmem:[%s243 + $0x10] sm:$0xff] %vm1499, %v1542
      %1547 = vst.msk [vmem:[%s243 + $0x18] sm:$0xff] %vm1499, %v1543
      %s1548 = smul.u32 4, %s15
      %p1549 = scmp.lt.s32.totalorder %s1548, 7
      %s1550 = scalar_select %p1549, %s1548, 7
      %s1551 = smul.addr %s1550, 8
      %s1552 = scalar_lea.vmem %s4, %s1551
      // Predicated region
      $region37: #{tpu_custom_call.1} parent=35 // pred_check
        %p1553 = pneg %p132
      $region38: #{tpu_custom_call.1} parent=35 // pred_check_branch
        %1555 = sbr.rel (%p1553) target = $region40
      $region39: #{tpu_custom_call.1} parent=35 // pred_region
        %s1556 = smul.u32 4, %s15
      $region40: #{tpu_custom_call.1} parent=35 // pred_fallthru
        _
    $region36: #{tpu_custom_call.1} parent=5 // pred_fallthru
      _
    %p1557 = scmp.le.s32.totalorder 2, %s10
    // Predicated region
    $region41: #{tpu_custom_call.1} parent=5 // pred_check
      %p1558 = pneg %p1557
    $region42: #{tpu_custom_call.1} parent=5 // pred_check_branch
      %1560 = sbr.rel (%p1558) target = $region44
    $region43: #{tpu_custom_call.1} parent=5 // pred_region
      %s1561 = ssub.s32 %s10, 2
      // Predicated region
      $region45: #{tpu_custom_call.1} parent=43 // pred_check
        %p1562 = pneg %p138
      $region46: #{tpu_custom_call.1} parent=43 // pred_check_branch
        %1564 = sbr.rel (%p1562) target = $region48
      $region47: #{tpu_custom_call.1} parent=43 // pred_region
        %s1565 = smul.u32 4, %s16
        %p1566 = scmp.lt.s32.totalorder %s1565, 7
        %s1567 = scalar_select %p1566, %s1565, 7
        %s1568 = smul.addr %s1567, 8
        %s1569 = scalar_lea.vmem %s4, %s1568
      $region48: #{tpu_custom_call.1} parent=43 // pred_fallthru
        _
    $region44: #{tpu_custom_call.1} parent=5 // pred_fallthru
      _
  $region6: #{tpu_custom_call.1} parent=0 // loop_footer
    %s14 = sadd.s32 1, %s10
  $region7: #{tpu_custom_call.1} parent=0 // loop_footer_branch
    %9 = sbr.rel target = $region3
  $region8: #{tpu_custom_call.1} parent=0 // loop_exit
    _

</llo_original>
